<compile_context>
chip_gen: v7x
topology: tpu7x:2x2x1
jax: 0.10.0
libtpu: 0.0.40
codegen_flags: <defaults>
</compile_context>

<pallas_src>
import functools

import jax
import jax.numpy as jnp
from jax import lax
from jax.experimental import pallas as pl
from jax.experimental.pallas import tpu as pltpu

_LANE = 128
_SUBLANE_BF16 = 16
_K_CHUNK_MAX = 512
_MIB = 1024 * 1024


def _round_up(x, m):
    return (x + m - 1) // m * m


def _tpu_vmem_capacity_bytes():
    """Physical per-core VMEM; falls back to 128 MiB if the query fails."""
    try:
        info = pltpu.get_tpu_info()
        cap = getattr(info, "vmem_capacity_bytes", None)
        if cap:
            return int(cap)
    except Exception:
        pass
    return 128 * _MIB


def _vmem_cap_bytes(physical_vmem):
    """Usable VMEM cap, leaving headroom for Mosaic-internal scratch."""
    if physical_vmem <= 64 * _MIB:     # v7x-class (64 MiB physical per TC)
        return 56 * _MIB
    return 100 * _MIB                  # v5e / v6e (128 MiB physical)


def _vmem_estimate_bytes(tile_n, pp, hp, kp, kc):
    """Resident footprint estimate including in-kernel intermediates."""
    bf16, f32 = 2, 4
    # single-buffered invariants (bias rows padded to 8 sublanes)
    invariant = (pp * hp + kp * hp + hp * pp) * bf16 + 8 * (hp + pp + kp) * f32
    # double-buffered streamed blocks: patches in; z, zq, xrec out
    streamed = 2 * tile_n * (pp * bf16 + 2 * hp * f32 + pp * f32)
    # per-chunk intermediates (cross/dist/col/onehot/...) + carried zq/min_d/z
    interm = tile_n * kc * 18 + tile_n * hp * 14 + tile_n * pp * bf16
    return invariant + streamed + interm


def _choose_tiling(n, max_tile, prefer_even_grid):
    """tile_n (multiple of 16) and padded row count; even grid for v7x-class."""
    tile = max(_SUBLANE_BF16, min(max_tile, _round_up(n, _SUBLANE_BF16)))
    tile = (tile // _SUBLANE_BF16) * _SUBLANE_BF16
    num = -(-n // tile)
    if prefer_even_grid:
        if num == 1 and n > _SUBLANE_BF16:
            tile = _round_up(-(-n // 2), _SUBLANE_BF16)
            num = -(-n // tile)
        if num % 2 == 1 and num > 1:
            num += 1
    return tile, num * tile


def _invariant_spec(block_shape):
    """Grid-invariant operand: single-buffer it (it never changes across steps)."""
    index_map = lambda i: (0,) * len(block_shape)
    try:
        return pl.BlockSpec(block_shape, index_map, pipeline_mode=pl.Buffered(1))
    except Exception:   # older jax without pipeline_mode: fall back to default
        return pl.BlockSpec(block_shape, index_map)


def _vqvae_kernel(patches_ref, we_ref, be_ref, cb_ref, cbsq_ref, wd_ref, bd_ref,
                  z_ref, zq_ref, xrec_ref, *, k_chunk):
    """Fused encoder matmul -> chunked nearest-codebook VQ -> decoder matmul."""
    patches = patches_ref[...]                               # (TN, Pp) bf16

    # ---- encoder: strided conv expressed as patch matmul (bf16 MXU, f32 acc)
    z = jnp.dot(patches, we_ref[...],
                preferred_element_type=jnp.float32) + be_ref[...]
    z_ref[...] = z                                           # (TN, Hp) f32
    z_bf = z.astype(jnp.bfloat16)

    tn = patches.shape[0]
    kp, hp = cb_ref.shape
    kc = k_chunk
    n_chunks = kp // kc

    # ---- find_codebook: argmin_k ||z - c_k||^2 == argmin_k (||c_k||^2 - 2 z.c_k)
    # (||z||^2 is row-constant -> dropped; ||c_k||^2 precomputed in the wrapper;
    #  padded codebook rows carry ||c||^2 = 1e30 so they can never win.)
    # The codebook axis is chunked so no (TN, Kp) intermediate is materialized;
    # a running (min_dist, zq) is carried across chunks.
    col = lax.broadcasted_iota(jnp.int32, (tn, kc), 1)       # hoisted out of loop
    min_d = jnp.full((tn, 1), jnp.inf, dtype=jnp.float32)
    zq = jnp.zeros((tn, hp), dtype=jnp.float32)

    for c in range(n_chunks):                                # static, unrolled
        cb_c = cb_ref[pl.ds(c * kc, kc), :]                  # (kc, Hp) bf16
        cross = lax.dot_general(z_bf, cb_c, (((1,), (1,)), ((), ())),
                                preferred_element_type=jnp.float32)   # (TN, kc)
        dist = cbsq_ref[:, pl.ds(c * kc, kc)] - 2.0 * cross            # (TN, kc)
        local_min = jnp.min(dist, axis=-1, keepdims=True)              # (TN, 1)
        # first-occurrence argmin inside the chunk (torch.argmin semantics)
        local_idx = jnp.min(jnp.where(dist == local_min, col, kc),
                            axis=-1, keepdims=True)                    # (TN, 1)
        onehot = (local_idx == col).astype(jnp.bfloat16)               # (TN, kc)
        zq_c = jnp.dot(onehot, cb_c, preferred_element_type=jnp.float32)
        better = local_min < min_d   # strict '<': earlier chunks win ties
        zq = jnp.where(better, zq_c, zq)
        min_d = jnp.minimum(min_d, local_min)

    zq_ref[...] = zq                                         # (TN, Hp) f32

    # ---- decoder: conv-transpose as zq @ dec_w (K/Hd fewer flops than
    #      decoding from the one-hot, and a much smaller resident weight).
    xrec_ref[...] = jnp.dot(zq.astype(jnp.bfloat16), wd_ref[...],
                            preferred_element_type=jnp.float32) + bd_ref[...]


def vq_vae_forward(x, params, latent_size, max_tile_n=None):
    """x: (B, C, H, W) NCHW float32. Returns dict with 'x', 'z', 'zq' (NCHW)."""
    B, C, H, W = x.shape
    L = latent_size
    ds = H // L
    P = C * ds * ds
    cb = params["code_books"]                                # (K, Hd) f32
    K, Hd = cb.shape

    Pp = _round_up(P, _LANE)
    Hp = _round_up(Hd, _LANE)
    Kp = _round_up(K, _LANE)
    kc = _K_CHUNK_MAX if Kp > _K_CHUNK_MAX else Kp
    Kp = _round_up(Kp, kc)

    vmem_phys = _tpu_vmem_capacity_bytes()
    vmem_cap = _vmem_cap_bytes(vmem_phys)
    small_vmem = vmem_phys <= 64 * _MIB    # v7x-class: 2 TCs, keep the grid even
    if max_tile_n is None:
        max_tile_n = 256 if small_vmem else 512

    N = B * L * L
    tile_n, n_pad = _choose_tiling(N, max_tile_n, prefer_even_grid=small_vmem)
    # shrink the tile if the (tile, chunk) footprint does not fit the VMEM cap
    while _vmem_estimate_bytes(tile_n, Pp, Hp, Kp, kc) > vmem_cap and tile_n > 64:
        tile_n = max(64, ((tile_n // 2) // _SUBLANE_BF16) * _SUBLANE_BF16)
        n_pad = -(-N // tile_n) * tile_n
        if small_vmem and (n_pad // tile_n) % 2 == 1 and n_pad // tile_n > 1:
            n_pad += tile_n
    grid = (n_pad // tile_n,)
    vmem_limit = int(min(vmem_cap,
                         max(32 * _MIB,
                             1.25 * _vmem_estimate_bytes(tile_n, Pp, Hp, Kp, kc))))

    # patchify NCHW -> (B*L*L, C*ds*ds), row order = (b, lh, lw); pad rows/lanes.
    patches = (x.reshape(B, C, L, ds, L, ds)
                 .transpose(0, 2, 4, 1, 3, 5)
                 .reshape(N, P))
    patches = jnp.pad(patches, ((0, n_pad - N), (0, Pp - P))).astype(jnp.bfloat16)

    # ---- grid-invariant operands, padded & precomputed in the wrapper -------
    enc_w = jnp.pad(params["enc_w"],
                    ((0, Pp - P), (0, Hp - Hd))).astype(jnp.bfloat16)   # (Pp,Hp)
    enc_b = jnp.pad(params["enc_b"], ((0, 0), (0, Hp - Hd)))            # (1,Hp) f32
    cb_bf16 = jnp.pad(cb, ((0, Kp - K), (0, Hp - Hd))).astype(jnp.bfloat16)
    cb_sq = jnp.pad(jnp.sum(cb * cb, axis=-1), (0, Kp - K),
                    constant_values=jnp.float32(1e30))[None, :]         # (1,Kp)
    dec_w = jnp.pad(params["dec_w"],
                    ((0, Hp - Hd), (0, Pp - P))).astype(jnp.bfloat16)   # (Hp,Pp)
    dec_b = jnp.pad(params["dec_b"], ((0, 0), (0, Pp - P)))             # (1,Pp)

    kernel = functools.partial(_vqvae_kernel, k_chunk=kc)

    z_pad, zq_pad, xrec_pad = pl.pallas_call(
        kernel,
        out_shape=(
            jax.ShapeDtypeStruct((n_pad, Hp), jnp.float32),
            jax.ShapeDtypeStruct((n_pad, Hp), jnp.float32),
            jax.ShapeDtypeStruct((n_pad, Pp), jnp.float32),
        ),
        grid=grid,
        in_specs=[
            pl.BlockSpec((tile_n, Pp), lambda i: (i, 0)),   # patches (tiled over N)
            _invariant_spec((Pp, Hp)),                      # encoder weight
            _invariant_spec((1, Hp)),                       # encoder bias
            _invariant_spec((Kp, Hp)),                      # codebook
            _invariant_spec((1, Kp)),                       # ||codebook||^2
            _invariant_spec((Hp, Pp)),                      # decoder weight
            _invariant_spec((1, Pp)),                       # decoder bias
        ],
        out_specs=(
            pl.BlockSpec((tile_n, Hp), lambda i: (i, 0)),   # z
            pl.BlockSpec((tile_n, Hp), lambda i: (i, 0)),   # zq
            pl.BlockSpec((tile_n, Pp), lambda i: (i, 0)),   # reconstructed patches
        ),
        compiler_params=pltpu.CompilerParams(
            dimension_semantics=("parallel",),
            vmem_limit_bytes=vmem_limit),
    )(patches, enc_w, enc_b, cb_bf16, cb_sq, dec_w, dec_b)

    # back to NCHW (kept to preserve the PyTorch module's output layout).
    z_nchw = z_pad[:N, :Hd].reshape(B, L, L, Hd).transpose(0, 3, 1, 2)
    zq_nchw = zq_pad[:N, :Hd].reshape(B, L, L, Hd).transpose(0, 3, 1, 2)
    x_rec = (xrec_pad[:N, :P].reshape(B, L, L, C, ds, ds)
                              .transpose(0, 3, 1, 4, 2, 5)
                              .reshape(B, C, H, W))

    # straight-through estimator: z = zq + (z - zq).detach()
    z_st = zq_nchw + lax.stop_gradient(z_nchw - zq_nchw)

    return {"x": x_rec, "z": z_st, "zq": zq_nchw}


def init_params(key, in_channels, hidden_size, down_sample, K):
    """Deterministic param init matching the module __init__ shapes/distributions."""
    P = in_channels * down_sample * down_sample
    k1, k2, k3 = jax.random.split(key, 3)

    # xavier_uniform for Conv2d weight (hidden, C, ds, ds):
    #   fan_in = C*ds*ds, fan_out = hidden*ds*ds
    # NOTE: for PyTorch checkpoints, enc_w = conv_weight.reshape(hidden, C*ds*ds).T
    # (C, kh, kw flatten order) to match the (b, lh, lw, C, ds, ds) patchify.
    fan_in = P
    fan_out = hidden_size * down_sample * down_sample
    lim = (6.0 / (fan_in + fan_out)) ** 0.5
    enc_w = jax.random.uniform(k1, (P, hidden_size), jnp.float32, -lim, lim)

    # xavier_uniform for ConvTranspose2d weight (hidden, C, ds, ds): same fans
    dec_w = jax.random.uniform(k2, (hidden_size, P), jnp.float32, -lim, lim)

    enc_b = jnp.zeros((1, hidden_size), jnp.float32)   # constant_(bias, 0)
    dec_b = jnp.zeros((1, P), jnp.float32)

    # code_books ~ U(-1/K, 1/K)
    code_books = jax.random.uniform(k3, (K, hidden_size), jnp.float32,
                                    -1.0 / K, 1.0 / K)

    return {"enc_w": enc_w, "enc_b": enc_b,
            "dec_w": dec_w, "dec_b": dec_b,
            "code_books": code_books}


if __name__ == "__main__":
    # small shapes consistent with the module: input_size % latent_size == 0
    B, C = 2, 3
    INPUT_SIZE, LATENT_SIZE = 16, 8
    HIDDEN, K = 32, 64

    key = jax.random.PRNGKey(0)
    kx, kp = jax.random.split(key)
    x = jax.random.normal(kx, (B, C, INPUT_SIZE, INPUT_SIZE), jnp.float32)
    params = init_params(kp, C, HIDDEN, INPUT_SIZE // LATENT_SIZE, K)

    out = vq_vae_forward(x, params, LATENT_SIZE)
    jax.block_until_ready(out)

    assert out["x"].shape == (B, C, INPUT_SIZE, INPUT_SIZE)
    assert out["z"].shape == (B, HIDDEN, LATENT_SIZE, LATENT_SIZE)
    assert out["zq"].shape == (B, HIDDEN, LATENT_SIZE, LATENT_SIZE)
    print("KERNEL_OK")
</pallas_src>

<mosaic_0001>
module attributes {stable_mosaic.version = 11 : i64} {
  func.func @_vqvae_kernel(%arg0: i32, %arg1: memref<128x128xbf16, #tpu.memory_space<vmem>>, %arg2: memref<128x128xbf16, #tpu.memory_space<vmem>>, %arg3: memref<1x128xf32, #tpu.memory_space<vmem>>, %arg4: memref<128x128xbf16, #tpu.memory_space<vmem>>, %arg5: memref<1x128xf32, #tpu.memory_space<vmem>>, %arg6: memref<128x128xbf16, #tpu.memory_space<vmem>>, %arg7: memref<1x128xf32, #tpu.memory_space<vmem>>, %arg8: memref<128x128xf32, #tpu.memory_space<vmem>>, %arg9: memref<128x128xf32, #tpu.memory_space<vmem>>, %arg10: memref<128x128xf32, #tpu.memory_space<vmem>>) attributes {dimension_semantics = [#tpu.dimension_semantics<parallel>], iteration_bounds = array<i64: 1>, scalar_prefetch = 0 : i64, scratch_operands = 0 : i64, tpu.core_type = #tpu.core_type<tc>, window_params = [{transform_indices = @transform_0, window_bounds = array<i64: 128, 128>}, {pipeline_mode = #tpu.pipeline_mode<synchronous>, transform_indices = @transform_1, window_bounds = array<i64: 128, 128>}, {pipeline_mode = #tpu.pipeline_mode<synchronous>, transform_indices = @transform_2, window_bounds = array<i64: 1, 128>}, {pipeline_mode = #tpu.pipeline_mode<synchronous>, transform_indices = @transform_3, window_bounds = array<i64: 128, 128>}, {pipeline_mode = #tpu.pipeline_mode<synchronous>, transform_indices = @transform_4, window_bounds = array<i64: 1, 128>}, {pipeline_mode = #tpu.pipeline_mode<synchronous>, transform_indices = @transform_5, window_bounds = array<i64: 128, 128>}, {pipeline_mode = #tpu.pipeline_mode<synchronous>, transform_indices = @transform_6, window_bounds = array<i64: 1, 128>}, {transform_indices = @transform_7, window_bounds = array<i64: 128, 128>}, {transform_indices = @transform_8, window_bounds = array<i64: 128, 128>}, {transform_indices = @transform_9, window_bounds = array<i64: 128, 128>}]} {
    %c0 = arith.constant 0 : index
    %c0_0 = arith.constant 0 : index
    %0 = vector.load %arg1[%c0, %c0_0] : memref<128x128xbf16, #tpu.memory_space<vmem>>, vector<128x128xbf16>
    %c0_1 = arith.constant 0 : index
    %c0_2 = arith.constant 0 : index
    %1 = vector.load %arg2[%c0_1, %c0_2] : memref<128x128xbf16, #tpu.memory_space<vmem>>, vector<128x128xbf16>
    %cst = arith.constant dense<0.000000e+00> : vector<128x128xf32>
    %2 = tpu.matmul %0, %1, %cst {dimension_numbers = #tpu.dot_dimension_numbers<[1], [0], [0], [1], [0, 0, 1, 1], [], []>} : vector<128x128xbf16>, vector<128x128xbf16>, vector<128x128xf32> -> vector<128x128xf32>
    %c0_3 = arith.constant 0 : index
    %c0_4 = arith.constant 0 : index
    %3 = vector.load %arg3[%c0_3, %c0_4] : memref<1x128xf32, #tpu.memory_space<vmem>>, vector<1x128xf32>
    %4 = vector.broadcast %3 : vector<1x128xf32> to vector<128x128xf32>
    %5 = arith.addf %2, %4 : vector<128x128xf32>
    %c0_5 = arith.constant 0 : index
    %c0_6 = arith.constant 0 : index
    %6 = vector.load %arg8[%c0_5, %c0_6] : memref<128x128xf32, #tpu.memory_space<vmem>>, vector<128x128xf32>
    tpu.vector_store %arg8[%c0_5, %c0_6], %5 {strides = array<i32>} : memref<128x128xf32, #tpu.memory_space<vmem>>, vector<128x128xf32>,
    %7 = arith.truncf %5 : vector<128x128xf32> to vector<128x128xbf16>
    %8 = tpu.iota {dimensions = array<i32: 1>} : vector<128x128xi32>
    %cst_7 = arith.constant 0x7F800000 : f32
    %9 = vector.broadcast %cst_7 : f32 to vector<128x1xf32>
    %cst_8 = arith.constant 0.000000e+00 : f32
    %10 = vector.broadcast %cst_8 : f32 to vector<128x128xf32>
    %c0_9 = arith.constant 0 : index
    %c0_10 = arith.constant 0 : index
    %11 = vector.load %arg4[%c0_9, %c0_10] : memref<128x128xbf16, #tpu.memory_space<vmem>>, vector<128x128xbf16>
    %cst_11 = arith.constant dense<0.000000e+00> : vector<128x128xf32>
    %12 = tpu.matmul %7, %11, %cst_11 {dimension_numbers = #tpu.dot_dimension_numbers<[1], [1], [0], [0], [0, 0, 1, 0], [], []>} : vector<128x128xbf16>, vector<128x128xbf16>, vector<128x128xf32> -> vector<128x128xf32>
    %c0_12 = arith.constant 0 : index
    %c0_13 = arith.constant 0 : index
    %13 = vector.load %arg5[%c0_12, %c0_13] : memref<1x128xf32, #tpu.memory_space<vmem>>, vector<1x128xf32>
    %cst_14 = arith.constant 2.000000e+00 : f32
    %14 = vector.broadcast %cst_14 : f32 to vector<128x128xf32>
    %15 = arith.mulf %14, %12 : vector<128x128xf32>
    %16 = vector.broadcast %13 : vector<1x128xf32> to vector<128x128xf32>
    %17 = arith.subf %16, %15 : vector<128x128xf32>
    %cst_15 = arith.constant dense<0x7F800000> : vector<128xf32>
    %18 = vector.multi_reduction <minimumf>, %17, %cst_15 [1] : vector<128x128xf32> to vector<128xf32>
    %19 = vector.shape_cast %18 : vector<128xf32> to vector<128x1xf32>
    %20 = vector.broadcast %19 : vector<128x1xf32> to vector<128x128xf32>
    %21 = arith.cmpf oeq, %17, %20 : vector<128x128xf32>
    %c128_i32 = arith.constant 128 : i32
    %22 = vector.broadcast %c128_i32 : i32 to vector<128x128xi32>
    %23 = arith.select %21, %8, %22 : vector<128x128xi1>, vector<128x128xi32>
    %cst_16 = arith.constant dense<2147483647> : vector<128xi32>
    %24 = vector.multi_reduction <minsi>, %23, %cst_16 [1] : vector<128x128xi32> to vector<128xi32>
    %25 = vector.shape_cast %24 : vector<128xi32> to vector<128x1xi32>
    %26 = vector.broadcast %25 : vector<128x1xi32> to vector<128x128xi32>
    %27 = arith.cmpi eq, %26, %8 : vector<128x128xi32>
    %28 = arith.extui %27 : vector<128x128xi1> to vector<128x128xi32>
    %29 = arith.sitofp %28 : vector<128x128xi32> to vector<128x128xf32>
    %30 = arith.truncf %29 : vector<128x128xf32> to vector<128x128xbf16>
    %cst_17 = arith.constant dense<0.000000e+00> : vector<128x128xf32>
    %31 = tpu.matmul %30, %11, %cst_17 {dimension_numbers = #tpu.dot_dimension_numbers<[1], [0], [0], [1], [0, 0, 1, 1], [], []>} : vector<128x128xbf16>, vector<128x128xbf16>, vector<128x128xf32> -> vector<128x128xf32>
    %32 = arith.cmpf olt, %19, %9 : vector<128x1xf32>
    %33 = vector.shape_cast %32 : vector<128x1xi1> to vector<128x1xi1>
    %34 = vector.broadcast %33 : vector<128x1xi1> to vector<128x128xi1>
    %35 = arith.select %34, %31, %10 : vector<128x128xi1>, vector<128x128xf32>
    %c0_18 = arith.constant 0 : index
    %c0_19 = arith.constant 0 : index
    %36 = vector.load %arg9[%c0_18, %c0_19] : memref<128x128xf32, #tpu.memory_space<vmem>>, vector<128x128xf32>
    tpu.vector_store %arg9[%c0_18, %c0_19], %35 {strides = array<i32>} : memref<128x128xf32, #tpu.memory_space<vmem>>, vector<128x128xf32>,
    %37 = arith.truncf %35 : vector<128x128xf32> to vector<128x128xbf16>
    %c0_20 = arith.constant 0 : index
    %c0_21 = arith.constant 0 : index
    %38 = vector.load %arg6[%c0_20, %c0_21] : memref<128x128xbf16, #tpu.memory_space<vmem>>, vector<128x128xbf16>
    %cst_22 = arith.constant dense<0.000000e+00> : vector<128x128xf32>
    %39 = tpu.matmul %37, %38, %cst_22 {dimension_numbers = #tpu.dot_dimension_numbers<[1], [0], [0], [1], [0, 0, 1, 1], [], []>} : vector<128x128xbf16>, vector<128x128xbf16>, vector<128x128xf32> -> vector<128x128xf32>
    %c0_23 = arith.constant 0 : index
    %c0_24 = arith.constant 0 : index
    %40 = vector.load %arg7[%c0_23, %c0_24] : memref<1x128xf32, #tpu.memory_space<vmem>>, vector<1x128xf32>
    %41 = vector.broadcast %40 : vector<1x128xf32> to vector<128x128xf32>
    %42 = arith.addf %39, %41 : vector<128x128xf32>
    %c0_25 = arith.constant 0 : index
    %c0_26 = arith.constant 0 : index
    %43 = vector.load %arg10[%c0_25, %c0_26] : memref<128x128xf32, #tpu.memory_space<vmem>>, vector<128x128xf32>
    tpu.vector_store %arg10[%c0_25, %c0_26], %42 {strides = array<i32>} : memref<128x128xf32, #tpu.memory_space<vmem>>, vector<128x128xf32>,
    return
  }
  func.func @transform_0(%arg0: i32) -> (i32, i32) {
    %c0_i32 = arith.constant 0 : i32
    %c0_i32_0 = arith.constant 0 : i32
    return %arg0, %c0_i32 : i32, i32
  }
  func.func @transform_1(%arg0: i32) -> (i32, i32) {
    %c0_i32 = arith.constant 0 : i32
    %c0_i32_0 = arith.constant 0 : i32
    %c0_i32_1 = arith.constant 0 : i32
    return %c0_i32, %c0_i32_0 : i32, i32
  }
  func.func @transform_2(%arg0: i32) -> (i32, i32) {
    %c0_i32 = arith.constant 0 : i32
    %c0_i32_0 = arith.constant 0 : i32
    %c0_i32_1 = arith.constant 0 : i32
    return %c0_i32, %c0_i32_0 : i32, i32
  }
  func.func @transform_3(%arg0: i32) -> (i32, i32) {
    %c0_i32 = arith.constant 0 : i32
    %c0_i32_0 = arith.constant 0 : i32
    %c0_i32_1 = arith.constant 0 : i32
    return %c0_i32, %c0_i32_0 : i32, i32
  }
  func.func @transform_4(%arg0: i32) -> (i32, i32) {
    %c0_i32 = arith.constant 0 : i32
    %c0_i32_0 = arith.constant 0 : i32
    %c0_i32_1 = arith.constant 0 : i32
    return %c0_i32, %c0_i32_0 : i32, i32
  }
  func.func @transform_5(%arg0: i32) -> (i32, i32) {
    %c0_i32 = arith.constant 0 : i32
    %c0_i32_0 = arith.constant 0 : i32
    %c0_i32_1 = arith.constant 0 : i32
    return %c0_i32, %c0_i32_0 : i32, i32
  }
  func.func @transform_6(%arg0: i32) -> (i32, i32) {
    %c0_i32 = arith.constant 0 : i32
    %c0_i32_0 = arith.constant 0 : i32
    %c0_i32_1 = arith.constant 0 : i32
    return %c0_i32, %c0_i32_0 : i32, i32
  }
  func.func @transform_7(%arg0: i32) -> (i32, i32) {
    %c0_i32 = arith.constant 0 : i32
    %c0_i32_0 = arith.constant 0 : i32
    return %arg0, %c0_i32 : i32, i32
  }
  func.func @transform_8(%arg0: i32) -> (i32, i32) {
    %c0_i32 = arith.constant 0 : i32
    %c0_i32_0 = arith.constant 0 : i32
    return %arg0, %c0_i32 : i32, i32
  }
  func.func @transform_9(%arg0: i32) -> (i32, i32) {
    %c0_i32 = arith.constant 0 : i32
    %c0_i32_0 = arith.constant 0 : i32
    return %arg0, %c0_i32 : i32, i32
  }
}

</mosaic_0001>

<llo_original>
// kernel: tpu_custom_call.1
$region0: #{tpu_custom_call.1}
  #allocation0 [shape = 'u32[]', space=smem, size = 0x4, offset = 0x4, fixed_abs, tag = 'smem constant byte address 0x4 - core index']
  #allocation1 [shape = 'u32[144,128]{1,0:T(1,128)}', space=vmem, size = 0x12000, scoped, tag = 'internal scratch']
  %s0 = inlined_call_operand.hbm [shape: bf16[128,128], index: 0, kind: input, shape index: {}]
  %s1 = inlined_call_operand.hbm [shape: bf16[128,128], index: 1, kind: input, shape index: {}]
  %s2 = inlined_call_operand.vmem [shape: f32[1,128], index: 2, kind: input, shape index: {}]
  %s3 = inlined_call_operand.hbm [shape: bf16[128,128], index: 3, kind: input, shape index: {}]
  %s4 = inlined_call_operand.vmem [shape: f32[1,128], index: 4, kind: input, shape index: {}]
  %s5 = inlined_call_operand.hbm [shape: bf16[128,128], index: 5, kind: input, shape index: {}]
  %s6 = inlined_call_operand.vmem [shape: f32[1,128], index: 6, kind: input, shape index: {}]
  %s7 = inlined_call_operand.hbm [shape: f32[128,128], index: 7, kind: output, shape index: {0}]
  %s8 = inlined_call_operand.hbm [shape: f32[128,128], index: 8, kind: output, shape index: {1}]
  %s9 = inlined_call_operand.hbm [shape: f32[128,128], index: 9, kind: output, shape index: {2}]
  %10 = xla_tuple %s7, %s8, %s9
  %s11 = sld [smem:[#allocation0]]
  $region70: #{tpu_custom_call.1} parent=0
    _
  %s13 = ssub.s32 1, %s11
  %s14 = scalar_select 0, %s13, %s11
  $region1: #{tpu_custom_call.1} parent=0
    #allocation2 [shape = 'u8[32768]{0}', space=vmem, size = 0x8000, scoped, tag = 'input window, operand 0, single buffered']
    #allocation3 [shape = 's32[1]{0}', space=sflag, size = 0x4, scoped, tag = 'scoped memory for tpu_custom_call.1']
    #allocation4 [shape = 's32[1]{0}', space=sflag, size = 0x4, scoped, tag = 'scoped memory for tpu_custom_call.1']
    #allocation5 [shape = 'u8[32768]{0}', space=vmem, size = 0x8000, scoped, tag = 'input window, operand 1, single buffered']
    #allocation6 [shape = 's32[1]{0}', space=sflag, size = 0x4, scoped, tag = 'scoped memory for tpu_custom_call.1']
    #allocation7 [shape = 'u8[32768]{0}', space=vmem, size = 0x8000, scoped, tag = 'input window, operand 3, single buffered']
    #allocation8 [shape = 'u8[32768]{0}', space=vmem, size = 0x8000, scoped, tag = 'input window, operand 5, single buffered']
    #allocation9 [shape = 's32[1]{0}', space=sflag, size = 0x4, scoped, tag = 'scoped memory for tpu_custom_call.1']
    #allocation10 [shape = 'u8[65536]{0}', space=vmem, size = 0x10000, scoped, tag = 'output window, operand 0, single buffered']
    #allocation11 [shape = 'u8[65536]{0}', space=vmem, size = 0x10000, scoped, tag = 'output window, operand 1, single buffered']
    #allocation12 [shape = 's32[1]{0}', space=sflag, size = 0x4, scoped, tag = 'scoped memory for tpu_custom_call.1']
    #allocation13 [shape = 'u8[65536]{0}', space=vmem, size = 0x10000, scoped, tag = 'output window, operand 2, single buffered']
    %15 = vsyncpa [#allocation3], 0
    %16 = vsyncpa [#allocation6], 0
    %17 = vsyncpa [#allocation9], 0
    %18 = vsyncpa [#allocation4], 0
    %19 = vsyncpa [#allocation12], 0
    // Predicated region
    $region2: #{tpu_custom_call.1} parent=1 // pred_check
      _
    $region3: #{tpu_custom_call.1} parent=1 // pred_check_branch
      %21 = sbr.rel (0) target = $region5
    $region4: #{tpu_custom_call.1} parent=1 // pred_region
      %s23 = ssub.s32 1024, 1024
      %24 = vsyncadd [#allocation3], %s23
      %s25 = sshll.u32 [#allocation2], 4
      %s26 = int_to_ptr.vmem [resolvable:$true] %s25
      %31 = dma.hbm_to_vmem [thread:$0]  %s0, 1024, %s26, [#allocation3], 64, 64, 4
    $region5: #{tpu_custom_call.1} parent=1 // pred_fallthru
      _
    // Predicated region
    $region6: #{tpu_custom_call.1} parent=1 // pred_check
      _
    $region7: #{tpu_custom_call.1} parent=1 // pred_check_branch
      %33 = sbr.rel (0) target = $region9
    $region8: #{tpu_custom_call.1} parent=1 // pred_region
      %s35 = ssub.s32 1024, 1024
      %36 = vsyncadd [#allocation6], %s35
      %s37 = sshll.u32 [#allocation5], 4
      %s38 = int_to_ptr.vmem [resolvable:$true] %s37
      %43 = dma.hbm_to_vmem [thread:$0]  %s1, 1024, %s38, [#allocation6], 64, 64, 4
    $region9: #{tpu_custom_call.1} parent=1 // pred_fallthru
      _
    // Predicated region
    $region10: #{tpu_custom_call.1} parent=1 // pred_check
      _
    $region11: #{tpu_custom_call.1} parent=1 // pred_check_branch
      %45 = sbr.rel (0) target = $region13
    $region12: #{tpu_custom_call.1} parent=1 // pred_region
      _
    $region13: #{tpu_custom_call.1} parent=1 // pred_fallthru
      _
    // Predicated region
    $region14: #{tpu_custom_call.1} parent=1 // pred_check
      _
    $region15: #{tpu_custom_call.1} parent=1 // pred_check_branch
      %47 = sbr.rel (0) target = $region17
    $region16: #{tpu_custom_call.1} parent=1 // pred_region
      %s49 = ssub.s32 1024, 1024
      %50 = vsyncadd [#allocation6], %s49
      %s51 = sshll.u32 [#allocation7], 4
      %s52 = int_to_ptr.vmem [resolvable:$true] %s51
      %57 = dma.hbm_to_vmem [thread:$0]  %s3, 1024, %s52, [#allocation6], 64, 64, 4
    $region17: #{tpu_custom_call.1} parent=1 // pred_fallthru
      _
    // Predicated region
    $region18: #{tpu_custom_call.1} parent=1 // pred_check
      _
    $region19: #{tpu_custom_call.1} parent=1 // pred_check_branch
      %59 = sbr.rel (0) target = $region21
    $region20: #{tpu_custom_call.1} parent=1 // pred_region
      _
    $region21: #{tpu_custom_call.1} parent=1 // pred_fallthru
      _
    // Predicated region
    $region22: #{tpu_custom_call.1} parent=1 // pred_check
      _
    $region23: #{tpu_custom_call.1} parent=1 // pred_check_branch
      %61 = sbr.rel (0) target = $region25
    $region24: #{tpu_custom_call.1} parent=1 // pred_region
      %s63 = ssub.s32 1024, 1024
      %64 = vsyncadd [#allocation9], %s63
      %s65 = sshll.u32 [#allocation8], 4
      %s66 = int_to_ptr.vmem [resolvable:$true] %s65
      %71 = dma.hbm_to_vmem [thread:$0]  %s5, 1024, %s66, [#allocation9], 64, 64, 4
    $region25: #{tpu_custom_call.1} parent=1 // pred_fallthru
      _
    // Predicated region
    $region26: #{tpu_custom_call.1} parent=1 // pred_check
      _
    $region27: #{tpu_custom_call.1} parent=1 // pred_check_branch
      %73 = sbr.rel (0) target = $region29
    $region28: #{tpu_custom_call.1} parent=1 // pred_region
      _
    $region29: #{tpu_custom_call.1} parent=1 // pred_fallthru
      _
    // Predicated region
    $region30: #{tpu_custom_call.1} parent=1 // pred_check
      _
    $region31: #{tpu_custom_call.1} parent=1 // pred_check_branch
      %75 = sbr.rel (0) target = $region33
    $region32: #{tpu_custom_call.1} parent=1 // pred_region
      %76 = dma.done [#allocation3], 1024
    $region33: #{tpu_custom_call.1} parent=1 // pred_fallthru
      _
    // Predicated region
    $region34: #{tpu_custom_call.1} parent=1 // pred_check
      _
    $region35: #{tpu_custom_call.1} parent=1 // pred_check_branch
      %78 = sbr.rel (0) target = $region37
    $region36: #{tpu_custom_call.1} parent=1 // pred_region
      %79 = dma.done [#allocation6], 1024
    $region37: #{tpu_custom_call.1} parent=1 // pred_fallthru
      _
    // Predicated region
    $region38: #{tpu_custom_call.1} parent=1 // pred_check
      _
    $region39: #{tpu_custom_call.1} parent=1 // pred_check_branch
      %81 = sbr.rel (0) target = $region41
    $region40: #{tpu_custom_call.1} parent=1 // pred_region
      %82 = dma.done [#allocation6], 1024
    $region41: #{tpu_custom_call.1} parent=1 // pred_fallthru
      _
    // Predicated region
    $region42: #{tpu_custom_call.1} parent=1 // pred_check
      _
    $region43: #{tpu_custom_call.1} parent=1 // pred_check_branch
      %84 = sbr.rel (0) target = $region45
    $region44: #{tpu_custom_call.1} parent=1 // pred_region
      %85 = dma.done [#allocation9], 1024
    $region45: #{tpu_custom_call.1} parent=1 // pred_fallthru
      _
    %v87 = vld [vmem:[#allocation2] sm:$0xf]
    %v88 = vld [vmem:[#allocation2 + $0x4] sm:$0xf]
    %v89 = vld [vmem:[#allocation2 + $0x8] sm:$0xf]
    %v90 = vld [vmem:[#allocation2 + $0xc] sm:$0xf]
    %v91 = vld [vmem:[#allocation2 + $0x10] sm:$0xf]
    %v92 = vld [vmem:[#allocation2 + $0x14] sm:$0xf]
    %v93 = vld [vmem:[#allocation2 + $0x18] sm:$0xf]
    %v94 = vld [vmem:[#allocation2 + $0x1c] sm:$0xf]
    %v95 = vld [vmem:[#allocation2 + $0x20] sm:$0xf]
    %v96 = vld [vmem:[#allocation2 + $0x24] sm:$0xf]
    %v97 = vld [vmem:[#allocation2 + $0x28] sm:$0xf]
    %v98 = vld [vmem:[#allocation2 + $0x2c] sm:$0xf]
    %v99 = vld [vmem:[#allocation2 + $0x30] sm:$0xf]
    %v100 = vld [vmem:[#allocation2 + $0x34] sm:$0xf]
    %v101 = vld [vmem:[#allocation2 + $0x38] sm:$0xf]
    %v102 = vld [vmem:[#allocation2 + $0x3c] sm:$0xf]
    %v103 = vld [vmem:[#allocation5] sm:$0xf]
    %v104 = vld [vmem:[#allocation5 + $0x4] sm:$0xf]
    %v105 = vld [vmem:[#allocation5 + $0x8] sm:$0xf]
    %v106 = vld [vmem:[#allocation5 + $0xc] sm:$0xf]
    %v107 = vld [vmem:[#allocation5 + $0x10] sm:$0xf]
    %v108 = vld [vmem:[#allocation5 + $0x14] sm:$0xf]
    %v109 = vld [vmem:[#allocation5 + $0x18] sm:$0xf]
    %v110 = vld [vmem:[#allocation5 + $0x1c] sm:$0xf]
    %v111 = vld [vmem:[#allocation5 + $0x20] sm:$0xf]
    %v112 = vld [vmem:[#allocation5 + $0x24] sm:$0xf]
    %v113 = vld [vmem:[#allocation5 + $0x28] sm:$0xf]
    %v114 = vld [vmem:[#allocation5 + $0x2c] sm:$0xf]
    %v115 = vld [vmem:[#allocation5 + $0x30] sm:$0xf]
    %v116 = vld [vmem:[#allocation5 + $0x34] sm:$0xf]
    %v117 = vld [vmem:[#allocation5 + $0x38] sm:$0xf]
    %v118 = vld [vmem:[#allocation5 + $0x3c] sm:$0xf]
    %v119 = vld [vmem:[%s2] sm:$0x1]
    %v121 = vlaneseq
    %v122 = vshrl.u32 %v121, 7
    %v123 = vsub.s32 0, %v122
    %v124 = vrot.slane %v119, %v123
    %v142 = vunpack.c.l.b16 %v87
    %v143 = vunpack.c.l.b16 %v88
    %v144 = vunpack.c.l.b16 %v89
    %v145 = vunpack.c.l.b16 %v90
    %v146 = vunpack.c.l.b16 %v91
    %v147 = vunpack.c.l.b16 %v92
    %v148 = vunpack.c.l.b16 %v93
    %v149 = vunpack.c.l.b16 %v94
    %v150 = vunpack.c.l.b16 %v95
    %v151 = vunpack.c.l.b16 %v96
    %v152 = vunpack.c.l.b16 %v97
    %v153 = vunpack.c.l.b16 %v98
    %v154 = vunpack.c.l.b16 %v99
    %v155 = vunpack.c.l.b16 %v100
    %v156 = vunpack.c.l.b16 %v101
    %v157 = vunpack.c.l.b16 %v102
    %v158 = vpack.c.b16 %v143, %v142
    %v159 = vpack.c.b16 %v145, %v144
    %v160 = vpack.c.b16 %v147, %v146
    %v161 = vpack.c.b16 %v149, %v148
    %v162 = vpack.c.b16 %v151, %v150
    %v163 = vpack.c.b16 %v153, %v152
    %v164 = vpack.c.b16 %v155, %v154
    %v165 = vpack.c.b16 %v157, %v156
    %v190 = vunpack.c.l.b16 %v103
    %v191 = vunpack.c.l.b16 %v104
    %v192 = vunpack.c.l.b16 %v105
    %v193 = vunpack.c.l.b16 %v106
    %v194 = vunpack.c.l.b16 %v107
    %v195 = vunpack.c.l.b16 %v108
    %v196 = vunpack.c.l.b16 %v109
    %v197 = vunpack.c.l.b16 %v110
    %v198 = vunpack.c.l.b16 %v111
    %v199 = vunpack.c.l.b16 %v112
    %v200 = vunpack.c.l.b16 %v113
    %v201 = vunpack.c.l.b16 %v114
    %v202 = vunpack.c.l.b16 %v115
    %v203 = vunpack.c.l.b16 %v116
    %v204 = vunpack.c.l.b16 %v117
    %v205 = vunpack.c.l.b16 %v118
    %v206 = vpack.c.b16 %v191, %v190
    %v207 = vpack.c.b16 %v193, %v192
    %v208 = vpack.c.b16 %v195, %v194
    %v209 = vpack.c.b16 %v197, %v196
    %v210 = vpack.c.b16 %v199, %v198
    %v211 = vpack.c.b16 %v201, %v200
    %v212 = vpack.c.b16 %v203, %v202
    %v213 = vpack.c.b16 %v205, %v204
    %222 = vmatprep.subr.bf16.mxu0 0
    %223 = vmatpush1.bf16.msra.mxu0 %v206
    %224 = vmatprep.subr.bf16.mxu0 0
    %225 = vmatpush1.bf16.msra.mxu0 %v207
    %226 = vmatprep.subr.bf16.mxu0 0
    %227 = vmatpush1.bf16.msra.mxu0 %v208
    %228 = vmatprep.subr.bf16.mxu0 0
    %229 = vmatpush1.bf16.msra.mxu0 %v209
    %230 = vmatprep.subr.bf16.mxu0 0
    %231 = vmatpush1.bf16.msra.mxu0 %v210
    %232 = vmatprep.subr.bf16.mxu0 0
    %233 = vmatpush1.bf16.msra.mxu0 %v211
    %234 = vmatprep.subr.bf16.mxu0 0
    %235 = vmatpush1.bf16.msra.mxu0 %v212
    %236 = vmatprep.subr.bf16.mxu0 0
    %237 = vmatpush1.bf16.msra.mxu0 %v213
    %238 = vmatprep.subr.bf16.mxu0 0
    %239 = vmatpush1.bf16.msra.mxu0 0
    %240 = vmatprep.subr.bf16.mxu0 0
    %241 = vmatpush1.bf16.msra.mxu0 0
    %242 = vmatprep.subr.bf16.mxu0 0
    %243 = vmatpush1.bf16.msra.mxu0 0
    %244 = vmatprep.subr.bf16.mxu0 0
    %245 = vmatpush1.bf16.msra.mxu0 0
    %246 = vmatprep.subr.bf16.mxu0 0
    %247 = vmatpush1.bf16.msra.mxu0 0
    %248 = vmatprep.subr.bf16.mxu0 0
    %249 = vmatpush1.bf16.msra.mxu0 0
    %250 = vmatprep.subr.bf16.mxu0 0
    %251 = vmatpush1.bf16.msra.mxu0 0
    %252 = vmatprep.subr.bf16.mxu0 0
    %253 = vmatpush1.bf16.msra.mxu0 0
    %254 = vmatprep.mubr.bf16.mxu0 0
    %255 = vmatmul.mubr.bf16.gmra.mrb[0].mxu0 %v158
    %v256 = vpop.f32.mrb[0].mxu0
    %v257 = vadd.f32 %v124, %v256
    %v258 = vpop.f32.mrb[0].mxu0
    %v259 = vpop.f32.mrb[0].mxu0
    %v260 = vadd.f32 %v124, %v259
    %v261 = vpop.f32.mrb[0].mxu0
    %262 = vmatprep.mubr.bf16.mxu0 0
    %263 = vmatmul.mubr.bf16.gmra.mrb[0].mxu0 %v159
    %v264 = vpop.f32.mrb[0].mxu0
    %v265 = vadd.f32 %v124, %v264
    %v266 = vpop.f32.mrb[0].mxu0
    %v267 = vpop.f32.mrb[0].mxu0
    %v268 = vadd.f32 %v124, %v267
    %v269 = vpop.f32.mrb[0].mxu0
    %270 = vmatprep.mubr.bf16.mxu0 0
    %271 = vmatmul.mubr.bf16.gmra.mrb[0].mxu0 %v160
    %v272 = vpop.f32.mrb[0].mxu0
    %v273 = vadd.f32 %v124, %v272
    %v274 = vpop.f32.mrb[0].mxu0
    %v275 = vpop.f32.mrb[0].mxu0
    %v276 = vadd.f32 %v124, %v275
    %v277 = vpop.f32.mrb[0].mxu0
    %278 = vmatprep.mubr.bf16.mxu0 0
    %279 = vmatmul.mubr.bf16.gmra.mrb[0].mxu0 %v161
    %v280 = vpop.f32.mrb[0].mxu0
    %v281 = vadd.f32 %v124, %v280
    %v282 = vpop.f32.mrb[0].mxu0
    %v283 = vpop.f32.mrb[0].mxu0
    %v284 = vadd.f32 %v124, %v283
    %v285 = vpop.f32.mrb[0].mxu0
    %286 = vmatprep.mubr.bf16.mxu0 0
    %287 = vmatmul.mubr.bf16.gmra.mrb[0].mxu0 %v162
    %v288 = vpop.f32.mrb[0].mxu0
    %v289 = vadd.f32 %v124, %v288
    %v290 = vpop.f32.mrb[0].mxu0
    %v291 = vpop.f32.mrb[0].mxu0
    %v292 = vadd.f32 %v124, %v291
    %v293 = vpop.f32.mrb[0].mxu0
    %294 = vmatprep.mubr.bf16.mxu0 0
    %295 = vmatmul.mubr.bf16.gmra.mrb[0].mxu0 %v163
    %v296 = vpop.f32.mrb[0].mxu0
    %v297 = vadd.f32 %v124, %v296
    %v298 = vpop.f32.mrb[0].mxu0
    %v299 = vpop.f32.mrb[0].mxu0
    %v300 = vadd.f32 %v124, %v299
    %v301 = vpop.f32.mrb[0].mxu0
    %302 = vmatprep.mubr.bf16.mxu0 0
    %303 = vmatmul.mubr.bf16.gmra.mrb[0].mxu0 %v164
    %v304 = vpop.f32.mrb[0].mxu0
    %v305 = vadd.f32 %v124, %v304
    %v306 = vpop.f32.mrb[0].mxu0
    %v307 = vpop.f32.mrb[0].mxu0
    %v308 = vadd.f32 %v124, %v307
    %v309 = vpop.f32.mrb[0].mxu0
    %310 = vmatprep.mubr.bf16.mxu0 0
    %311 = vmatmul.mubr.bf16.gmra.mrb[0].mxu0 %v165
    %v312 = vpop.f32.mrb[0].mxu0
    %v313 = vadd.f32 %v124, %v312
    %v314 = vpop.f32.mrb[0].mxu0
    %v315 = vpop.f32.mrb[0].mxu0
    %v316 = vadd.f32 %v124, %v315
    %v317 = vpop.f32.mrb[0].mxu0
    %318 = vdwg.mxu0
    %319 = vst [vmem:[#allocation10] sm:$0xff] %v257
    %320 = vst [vmem:[#allocation10 + $0x8] sm:$0xff] %v260
    %321 = vst [vmem:[#allocation10 + $0x10] sm:$0xff] %v265
    %322 = vst [vmem:[#allocation10 + $0x18] sm:$0xff] %v268
    %323 = vst [vmem:[#allocation10 + $0x20] sm:$0xff] %v273
    %324 = vst [vmem:[#allocation10 + $0x28] sm:$0xff] %v276
    %325 = vst [vmem:[#allocation10 + $0x30] sm:$0xff] %v281
    %326 = vst [vmem:[#allocation10 + $0x38] sm:$0xff] %v284
    %327 = vst [vmem:[#allocation10 + $0x40] sm:$0xff] %v289
    %328 = vst [vmem:[#allocation10 + $0x48] sm:$0xff] %v292
    %329 = vst [vmem:[#allocation10 + $0x50] sm:$0xff] %v297
    %330 = vst [vmem:[#allocation10 + $0x58] sm:$0xff] %v300
    %331 = vst [vmem:[#allocation10 + $0x60] sm:$0xff] %v305
    %332 = vst [vmem:[#allocation10 + $0x68] sm:$0xff] %v308
    %333 = vst [vmem:[#allocation10 + $0x70] sm:$0xff] %v313
    %334 = vst [vmem:[#allocation10 + $0x78] sm:$0xff] %v316
    %v335 = vpack.c.bf16 %v260, %v257
    %v336 = vpack.c.bf16 %v268, %v265
    %v337 = vpack.c.bf16 %v276, %v273
    %v338 = vpack.c.bf16 %v284, %v281
    %v339 = vpack.c.bf16 %v292, %v289
    %v340 = vpack.c.bf16 %v300, %v297
    %v341 = vpack.c.bf16 %v308, %v305
    %v342 = vpack.c.bf16 %v316, %v313
    %v343 = vlaneseq
    %v344 = vand.u32 %v343, 127
    %v345 = vld [vmem:[#allocation7] sm:$0xf]
    %v346 = vld [vmem:[#allocation7 + $0x4] sm:$0xf]
    %v347 = vld [vmem:[#allocation7 + $0x8] sm:$0xf]
    %v348 = vld [vmem:[#allocation7 + $0xc] sm:$0xf]
    %v349 = vld [vmem:[#allocation7 + $0x10] sm:$0xf]
    %v350 = vld [vmem:[#allocation7 + $0x14] sm:$0xf]
    %v351 = vld [vmem:[#allocation7 + $0x18] sm:$0xf]
    %v352 = vld [vmem:[#allocation7 + $0x1c] sm:$0xf]
    %v353 = vld [vmem:[#allocation7 + $0x20] sm:$0xf]
    %v354 = vld [vmem:[#allocation7 + $0x24] sm:$0xf]
    %v355 = vld [vmem:[#allocation7 + $0x28] sm:$0xf]
    %v356 = vld [vmem:[#allocation7 + $0x2c] sm:$0xf]
    %v357 = vld [vmem:[#allocation7 + $0x30] sm:$0xf]
    %v358 = vld [vmem:[#allocation7 + $0x34] sm:$0xf]
    %v359 = vld [vmem:[#allocation7 + $0x38] sm:$0xf]
    %v360 = vld [vmem:[#allocation7 + $0x3c] sm:$0xf]
    %v377 = vunpack.c.l.b16 %v345
    %v378 = vunpack.c.l.b16 %v346
    %v379 = vunpack.c.l.b16 %v347
    %v380 = vunpack.c.l.b16 %v348
    %v381 = vunpack.c.l.b16 %v349
    %v382 = vunpack.c.l.b16 %v350
    %v383 = vunpack.c.l.b16 %v351
    %v384 = vunpack.c.l.b16 %v352
    %v385 = vunpack.c.l.b16 %v353
    %v386 = vunpack.c.l.b16 %v354
    %v387 = vunpack.c.l.b16 %v355
    %v388 = vunpack.c.l.b16 %v356
    %v389 = vunpack.c.l.b16 %v357
    %v390 = vunpack.c.l.b16 %v358
    %v391 = vunpack.c.l.b16 %v359
    %v392 = vunpack.c.l.b16 %v360
    %v393 = vpack.c.b16 %v378, %v377
    %v394 = vpack.c.b16 %v380, %v379
    %v395 = vpack.c.b16 %v382, %v381
    %v396 = vpack.c.b16 %v384, %v383
    %v397 = vpack.c.b16 %v386, %v385
    %v398 = vpack.c.b16 %v388, %v387
    %v399 = vpack.c.b16 %v390, %v389
    %v400 = vpack.c.b16 %v392, %v391
    %409 = vmatprep.subr.bf16.mxu0 0
    %410 = vmatpush1.bf16.xpose.msra.mxu0 %v393
    %411 = vmatprep.subr.bf16.mxu0 0
    %412 = vmatpush1.bf16.xpose.msra.mxu0 %v394
    %413 = vmatprep.subr.bf16.mxu0 0
    %414 = vmatpush1.bf16.xpose.msra.mxu0 %v395
    %415 = vmatprep.subr.bf16.mxu0 0
    %416 = vmatpush1.bf16.xpose.msra.mxu0 %v396
    %417 = vmatprep.subr.bf16.mxu0 0
    %418 = vmatpush1.bf16.xpose.msra.mxu0 %v397
    %419 = vmatprep.subr.bf16.mxu0 0
    %420 = vmatpush1.bf16.xpose.msra.mxu0 %v398
    %421 = vmatprep.subr.bf16.mxu0 0
    %422 = vmatpush1.bf16.xpose.msra.mxu0 %v399
    %423 = vmatprep.subr.bf16.mxu0 0
    %424 = vmatpush1.bf16.xpose.msra.mxu0 %v400
    %425 = vmatprep.subr.bf16.mxu0 0
    %426 = vmatpush1.bf16.xpose.msra.mxu0 0
    %427 = vmatprep.subr.bf16.mxu0 0
    %428 = vmatpush1.bf16.xpose.msra.mxu0 0
    %429 = vmatprep.subr.bf16.mxu0 0
    %430 = vmatpush1.bf16.xpose.msra.mxu0 0
    %431 = vmatprep.subr.bf16.mxu0 0
    %432 = vmatpush1.bf16.xpose.msra.mxu0 0
    %433 = vmatprep.subr.bf16.mxu0 0
    %434 = vmatpush1.bf16.xpose.msra.mxu0 0
    %435 = vmatprep.subr.bf16.mxu0 0
    %436 = vmatpush1.bf16.xpose.msra.mxu0 0
    %437 = vmatprep.subr.bf16.mxu0 0
    %438 = vmatpush1.bf16.xpose.msra.mxu0 0
    %439 = vmatprep.subr.bf16.mxu0 0
    %440 = vmatpush1.bf16.xpose.msra.mxu0 0
    %441 = vmatprep.mubr.bf16.mxu0 0
    %442 = vmatmul.mubr.bf16.gmra.mrb[0].mxu0 %v335
    %v443 = vpop.f32.mrb[0].mxu0
    %v444 = vadd.f32 0.0, %v443
    %v445 = vpop.f32.mrb[0].mxu0
    %v446 = vpop.f32.mrb[0].mxu0
    %v447 = vadd.f32 0.0, %v446
    %v448 = vpop.f32.mrb[0].mxu0
    %449 = vmatprep.mubr.bf16.mxu0 0
    %450 = vmatmul.mubr.bf16.gmra.mrb[0].mxu0 %v336
    %v451 = vpop.f32.mrb[0].mxu0
    %v452 = vadd.f32 0.0, %v451
    %v453 = vpop.f32.mrb[0].mxu0
    %v454 = vpop.f32.mrb[0].mxu0
    %v455 = vadd.f32 0.0, %v454
    %v456 = vpop.f32.mrb[0].mxu0
    %457 = vmatprep.mubr.bf16.mxu0 0
    %458 = vmatmul.mubr.bf16.gmra.mrb[0].mxu0 %v337
    %v459 = vpop.f32.mrb[0].mxu0
    %v460 = vadd.f32 0.0, %v459
    %v461 = vpop.f32.mrb[0].mxu0
    %v462 = vpop.f32.mrb[0].mxu0
    %v463 = vadd.f32 0.0, %v462
    %v464 = vpop.f32.mrb[0].mxu0
    %465 = vmatprep.mubr.bf16.mxu0 0
    %466 = vmatmul.mubr.bf16.gmra.mrb[0].mxu0 %v338
    %v467 = vpop.f32.mrb[0].mxu0
    %v468 = vadd.f32 0.0, %v467
    %v469 = vpop.f32.mrb[0].mxu0
    %v470 = vpop.f32.mrb[0].mxu0
    %v471 = vadd.f32 0.0, %v470
    %v472 = vpop.f32.mrb[0].mxu0
    %473 = vmatprep.mubr.bf16.mxu0 0
    %474 = vmatmul.mubr.bf16.gmra.mrb[0].mxu0 %v339
    %v475 = vpop.f32.mrb[0].mxu0
    %v476 = vadd.f32 0.0, %v475
    %v477 = vpop.f32.mrb[0].mxu0
    %v478 = vpop.f32.mrb[0].mxu0
    %v479 = vadd.f32 0.0, %v478
    %v480 = vpop.f32.mrb[0].mxu0
    %481 = vmatprep.mubr.bf16.mxu0 0
    %482 = vmatmul.mubr.bf16.gmra.mrb[0].mxu0 %v340
    %v483 = vpop.f32.mrb[0].mxu0
    %v484 = vadd.f32 0.0, %v483
    %v485 = vpop.f32.mrb[0].mxu0
    %v486 = vpop.f32.mrb[0].mxu0
    %v487 = vadd.f32 0.0, %v486
    %v488 = vpop.f32.mrb[0].mxu0
    %489 = vmatprep.mubr.bf16.mxu0 0
    %490 = vmatmul.mubr.bf16.gmra.mrb[0].mxu0 %v341
    %v491 = vpop.f32.mrb[0].mxu0
    %v492 = vadd.f32 0.0, %v491
    %v493 = vpop.f32.mrb[0].mxu0
    %v494 = vpop.f32.mrb[0].mxu0
    %v495 = vadd.f32 0.0, %v494
    %v496 = vpop.f32.mrb[0].mxu0
    %497 = vmatprep.mubr.bf16.mxu0 0
    %498 = vmatmul.mubr.bf16.gmra.mrb[0].mxu0 %v342
    %v499 = vpop.f32.mrb[0].mxu0
    %v500 = vadd.f32 0.0, %v499
    %v501 = vpop.f32.mrb[0].mxu0
    %v502 = vpop.f32.mrb[0].mxu0
    %v503 = vadd.f32 0.0, %v502
    %v504 = vpop.f32.mrb[0].mxu0
    %505 = vdwg.mxu0
    %v506 = vld [vmem:[%s4] sm:$0x1]
    %v507 = vmul.f32 %v444, 2.0
    %v508 = vmul.f32 %v447, 2.0
    %v509 = vmul.f32 %v452, 2.0
    %v510 = vmul.f32 %v455, 2.0
    %v511 = vmul.f32 %v460, 2.0
    %v512 = vmul.f32 %v463, 2.0
    %v513 = vmul.f32 %v468, 2.0
    %v514 = vmul.f32 %v471, 2.0
    %v515 = vmul.f32 %v476, 2.0
    %v516 = vmul.f32 %v479, 2.0
    %v517 = vmul.f32 %v484, 2.0
    %v518 = vmul.f32 %v487, 2.0
    %v519 = vmul.f32 %v492, 2.0
    %v520 = vmul.f32 %v495, 2.0
    %v521 = vmul.f32 %v500, 2.0
    %v522 = vmul.f32 %v503, 2.0
    %v524 = vlaneseq
    %v525 = vshrl.u32 %v524, 7
    %v526 = vsub.s32 0, %v525
    %v527 = vrot.slane %v506, %v526
    %v529 = vsub.f32 %v527, %v507
    %v530 = vsub.f32 %v527, %v508
    %v531 = vsub.f32 %v527, %v509
    %v532 = vsub.f32 %v527, %v510
    %v533 = vsub.f32 %v527, %v511
    %v534 = vsub.f32 %v527, %v512
    %v535 = vsub.f32 %v527, %v513
    %v536 = vsub.f32 %v527, %v514
    %v537 = vsub.f32 %v527, %v515
    %v538 = vsub.f32 %v527, %v516
    %v539 = vsub.f32 %v527, %v517
    %v540 = vsub.f32 %v527, %v518
    %v541 = vsub.f32 %v527, %v519
    %v542 = vsub.f32 %v527, %v520
    %v543 = vsub.f32 %v527, %v521
    %v544 = vsub.f32 %v527, %v522
    %545 = vmin.xlane.f32.xlu0 %v529
    %v546 = vpop.xlane.xlu0 %545
    %547 = vmin.xlane.f32.xlu0 %v530
    %v548 = vpop.xlane.xlu0 %547
    %549 = vmin.xlane.f32.xlu0 %v531
    %v550 = vpop.xlane.xlu0 %549
    %551 = vmin.xlane.f32.xlu0 %v532
    %v552 = vpop.xlane.xlu0 %551
    %553 = vmin.xlane.f32.xlu0 %v533
    %v554 = vpop.xlane.xlu0 %553
    %555 = vmin.xlane.f32.xlu0 %v534
    %v556 = vpop.xlane.xlu0 %555
    %557 = vmin.xlane.f32.xlu0 %v535
    %v558 = vpop.xlane.xlu0 %557
    %559 = vmin.xlane.f32.xlu0 %v536
    %v560 = vpop.xlane.xlu0 %559
    %561 = vmin.xlane.f32.xlu0 %v537
    %v562 = vpop.xlane.xlu0 %561
    %563 = vmin.xlane.f32.xlu0 %v538
    %v564 = vpop.xlane.xlu0 %563
    %565 = vmin.xlane.f32.xlu0 %v539
    %v566 = vpop.xlane.xlu0 %565
    %567 = vmin.xlane.f32.xlu0 %v540
    %v568 = vpop.xlane.xlu0 %567
    %569 = vmin.xlane.f32.xlu0 %v541
    %v570 = vpop.xlane.xlu0 %569
    %571 = vmin.xlane.f32.xlu0 %v542
    %v572 = vpop.xlane.xlu0 %571
    %573 = vmin.xlane.f32.xlu0 %v543
    %v574 = vpop.xlane.xlu0 %573
    %575 = vmin.xlane.f32.xlu0 %v544
    %v576 = vpop.xlane.xlu0 %575
    %vm577 = vcmp.eq.f32.partialorder %v529, %v546
    %vm578 = vcmp.eq.f32.partialorder %v530, %v548
    %vm579 = vcmp.eq.f32.partialorder %v531, %v550
    %vm580 = vcmp.eq.f32.partialorder %v532, %v552
    %vm581 = vcmp.eq.f32.partialorder %v533, %v554
    %vm582 = vcmp.eq.f32.partialorder %v534, %v556
    %vm583 = vcmp.eq.f32.partialorder %v535, %v558
    %vm584 = vcmp.eq.f32.partialorder %v536, %v560
    %vm585 = vcmp.eq.f32.partialorder %v537, %v562
    %vm586 = vcmp.eq.f32.partialorder %v538, %v564
    %vm587 = vcmp.eq.f32.partialorder %v539, %v566
    %vm588 = vcmp.eq.f32.partialorder %v540, %v568
    %vm589 = vcmp.eq.f32.partialorder %v541, %v570
    %vm590 = vcmp.eq.f32.partialorder %v542, %v572
    %vm591 = vcmp.eq.f32.partialorder %v543, %v574
    %vm592 = vcmp.eq.f32.partialorder %v544, %v576
    %v593 = vsel %vm577, %v344, 128
    %v594 = vsel %vm578, %v344, 128
    %v595 = vsel %vm579, %v344, 128
    %v596 = vsel %vm580, %v344, 128
    %v597 = vsel %vm581, %v344, 128
    %v598 = vsel %vm582, %v344, 128
    %v599 = vsel %vm583, %v344, 128
    %v600 = vsel %vm584, %v344, 128
    %v601 = vsel %vm585, %v344, 128
    %v602 = vsel %vm586, %v344, 128
    %v603 = vsel %vm587, %v344, 128
    %v604 = vsel %vm588, %v344, 128
    %v605 = vsel %vm589, %v344, 128
    %v606 = vsel %vm590, %v344, 128
    %v607 = vsel %vm591, %v344, 128
    %v608 = vsel %vm592, %v344, 128
    %v609 = vand.u32 %v593, 65535
    %v610 = vshra.s32 %v593, 16
    %v611 = vcvt.s32.f32 %v609
    %v612 = vcvt.s32.f32 %v610
    %613 = vmin.xlane.f32.xlu0 %v612
    %v614 = vpop.xlane.xlu0 %613
    %vm615 = vcmp.eq.f32.partialorder %v612, %v614
    %v616 = vsel %vm615, %v611, inf
    %617 = vmin.xlane.f32.xlu0 %v616
    %v618 = vpop.xlane.xlu0 %617
    %v619 = vcvt.f32.s32 %v618
    %v620 = vcvt.f32.s32 %v614
    %v621 = vshll.u32 %v620, 16
    %v622 = vadd.s32 %v621, %v619
    %v623 = vand.u32 %v594, 65535
    %v624 = vshra.s32 %v594, 16
    %v625 = vcvt.s32.f32 %v623
    %v626 = vcvt.s32.f32 %v624
    %627 = vmin.xlane.f32.xlu0 %v626
    %v628 = vpop.xlane.xlu0 %627
    %vm629 = vcmp.eq.f32.partialorder %v626, %v628
    %v630 = vsel %vm629, %v625, inf
    %631 = vmin.xlane.f32.xlu0 %v630
    %v632 = vpop.xlane.xlu0 %631
    %v633 = vcvt.f32.s32 %v632
    %v634 = vcvt.f32.s32 %v628
    %v635 = vshll.u32 %v634, 16
    %v636 = vadd.s32 %v635, %v633
    %v637 = vand.u32 %v595, 65535
    %v638 = vshra.s32 %v595, 16
    %v639 = vcvt.s32.f32 %v637
    %v640 = vcvt.s32.f32 %v638
    %641 = vmin.xlane.f32.xlu0 %v640
    %v642 = vpop.xlane.xlu0 %641
    %vm643 = vcmp.eq.f32.partialorder %v640, %v642
    %v644 = vsel %vm643, %v639, inf
    %645 = vmin.xlane.f32.xlu0 %v644
    %v646 = vpop.xlane.xlu0 %645
    %v647 = vcvt.f32.s32 %v646
    %v648 = vcvt.f32.s32 %v642
    %v649 = vshll.u32 %v648, 16
    %v650 = vadd.s32 %v649, %v647
    %v651 = vand.u32 %v596, 65535
    %v652 = vshra.s32 %v596, 16
    %v653 = vcvt.s32.f32 %v651
    %v654 = vcvt.s32.f32 %v652
    %655 = vmin.xlane.f32.xlu0 %v654
    %v656 = vpop.xlane.xlu0 %655
    %vm657 = vcmp.eq.f32.partialorder %v654, %v656
    %v658 = vsel %vm657, %v653, inf
    %659 = vmin.xlane.f32.xlu0 %v658
    %v660 = vpop.xlane.xlu0 %659
    %v661 = vcvt.f32.s32 %v660
    %v662 = vcvt.f32.s32 %v656
    %v663 = vshll.u32 %v662, 16
    %v664 = vadd.s32 %v663, %v661
    %v665 = vand.u32 %v597, 65535
    %v666 = vshra.s32 %v597, 16
    %v667 = vcvt.s32.f32 %v665
    %v668 = vcvt.s32.f32 %v666
    %669 = vmin.xlane.f32.xlu0 %v668
    %v670 = vpop.xlane.xlu0 %669
    %vm671 = vcmp.eq.f32.partialorder %v668, %v670
    %v672 = vsel %vm671, %v667, inf
    %673 = vmin.xlane.f32.xlu0 %v672
    %v674 = vpop.xlane.xlu0 %673
    %v675 = vcvt.f32.s32 %v674
    %v676 = vcvt.f32.s32 %v670
    %v677 = vshll.u32 %v676, 16
    %v678 = vadd.s32 %v677, %v675
    %v679 = vand.u32 %v598, 65535
    %v680 = vshra.s32 %v598, 16
    %v681 = vcvt.s32.f32 %v679
    %v682 = vcvt.s32.f32 %v680
    %683 = vmin.xlane.f32.xlu0 %v682
    %v684 = vpop.xlane.xlu0 %683
    %vm685 = vcmp.eq.f32.partialorder %v682, %v684
    %v686 = vsel %vm685, %v681, inf
    %687 = vmin.xlane.f32.xlu0 %v686
    %v688 = vpop.xlane.xlu0 %687
    %v689 = vcvt.f32.s32 %v688
    %v690 = vcvt.f32.s32 %v684
    %v691 = vshll.u32 %v690, 16
    %v692 = vadd.s32 %v691, %v689
    %v693 = vand.u32 %v599, 65535
    %v694 = vshra.s32 %v599, 16
    %v695 = vcvt.s32.f32 %v693
    %v696 = vcvt.s32.f32 %v694
    %697 = vmin.xlane.f32.xlu0 %v696
    %v698 = vpop.xlane.xlu0 %697
    %vm699 = vcmp.eq.f32.partialorder %v696, %v698
    %v700 = vsel %vm699, %v695, inf
    %701 = vmin.xlane.f32.xlu0 %v700
    %v702 = vpop.xlane.xlu0 %701
    %v703 = vcvt.f32.s32 %v702
    %v704 = vcvt.f32.s32 %v698
    %v705 = vshll.u32 %v704, 16
    %v706 = vadd.s32 %v705, %v703
    %v707 = vand.u32 %v600, 65535
    %v708 = vshra.s32 %v600, 16
    %v709 = vcvt.s32.f32 %v707
    %v710 = vcvt.s32.f32 %v708
    %711 = vmin.xlane.f32.xlu0 %v710
    %v712 = vpop.xlane.xlu0 %711
    %vm713 = vcmp.eq.f32.partialorder %v710, %v712
    %v714 = vsel %vm713, %v709, inf
    %715 = vmin.xlane.f32.xlu0 %v714
    %v716 = vpop.xlane.xlu0 %715
    %v717 = vcvt.f32.s32 %v716
    %v718 = vcvt.f32.s32 %v712
    %v719 = vshll.u32 %v718, 16
    %v720 = vadd.s32 %v719, %v717
    %v721 = vand.u32 %v601, 65535
    %v722 = vshra.s32 %v601, 16
    %v723 = vcvt.s32.f32 %v721
    %v724 = vcvt.s32.f32 %v722
    %725 = vmin.xlane.f32.xlu0 %v724
    %v726 = vpop.xlane.xlu0 %725
    %vm727 = vcmp.eq.f32.partialorder %v724, %v726
    %v728 = vsel %vm727, %v723, inf
    %729 = vmin.xlane.f32.xlu0 %v728
    %v730 = vpop.xlane.xlu0 %729
    %v731 = vcvt.f32.s32 %v730
    %v732 = vcvt.f32.s32 %v726
    %v733 = vshll.u32 %v732, 16
    %v734 = vadd.s32 %v733, %v731
    %v735 = vand.u32 %v602, 65535
    %v736 = vshra.s32 %v602, 16
    %v737 = vcvt.s32.f32 %v735
    %v738 = vcvt.s32.f32 %v736
    %739 = vmin.xlane.f32.xlu0 %v738
    %v740 = vpop.xlane.xlu0 %739
    %vm741 = vcmp.eq.f32.partialorder %v738, %v740
    %v742 = vsel %vm741, %v737, inf
    %743 = vmin.xlane.f32.xlu0 %v742
    %v744 = vpop.xlane.xlu0 %743
    %v745 = vcvt.f32.s32 %v744
    %v746 = vcvt.f32.s32 %v740
    %v747 = vshll.u32 %v746, 16
    %v748 = vadd.s32 %v747, %v745
    %v749 = vand.u32 %v603, 65535
    %v750 = vshra.s32 %v603, 16
    %v751 = vcvt.s32.f32 %v749
    %v752 = vcvt.s32.f32 %v750
    %753 = vmin.xlane.f32.xlu0 %v752
    %v754 = vpop.xlane.xlu0 %753
    %vm755 = vcmp.eq.f32.partialorder %v752, %v754
    %v756 = vsel %vm755, %v751, inf
    %757 = vmin.xlane.f32.xlu0 %v756
    %v758 = vpop.xlane.xlu0 %757
    %v759 = vcvt.f32.s32 %v758
    %v760 = vcvt.f32.s32 %v754
    %v761 = vshll.u32 %v760, 16
    %v762 = vadd.s32 %v761, %v759
    %v763 = vand.u32 %v604, 65535
    %v764 = vshra.s32 %v604, 16
    %v765 = vcvt.s32.f32 %v763
    %v766 = vcvt.s32.f32 %v764
    %767 = vmin.xlane.f32.xlu0 %v766
    %v768 = vpop.xlane.xlu0 %767
    %vm769 = vcmp.eq.f32.partialorder %v766, %v768
    %v770 = vsel %vm769, %v765, inf
    %771 = vmin.xlane.f32.xlu0 %v770
    %v772 = vpop.xlane.xlu0 %771
    %v773 = vcvt.f32.s32 %v772
    %v774 = vcvt.f32.s32 %v768
    %v775 = vshll.u32 %v774, 16
    %v776 = vadd.s32 %v775, %v773
    %v777 = vand.u32 %v605, 65535
    %v778 = vshra.s32 %v605, 16
    %v779 = vcvt.s32.f32 %v777
    %v780 = vcvt.s32.f32 %v778
    %781 = vmin.xlane.f32.xlu0 %v780
    %v782 = vpop.xlane.xlu0 %781
    %vm783 = vcmp.eq.f32.partialorder %v780, %v782
    %v784 = vsel %vm783, %v779, inf
    %785 = vmin.xlane.f32.xlu0 %v784
    %v786 = vpop.xlane.xlu0 %785
    %v787 = vcvt.f32.s32 %v786
    %v788 = vcvt.f32.s32 %v782
    %v789 = vshll.u32 %v788, 16
    %v790 = vadd.s32 %v789, %v787
    %v791 = vand.u32 %v606, 65535
    %v792 = vshra.s32 %v606, 16
    %v793 = vcvt.s32.f32 %v791
    %v794 = vcvt.s32.f32 %v792
    %795 = vmin.xlane.f32.xlu0 %v794
    %v796 = vpop.xlane.xlu0 %795
    %vm797 = vcmp.eq.f32.partialorder %v794, %v796
    %v798 = vsel %vm797, %v793, inf
    %799 = vmin.xlane.f32.xlu0 %v798
    %v800 = vpop.xlane.xlu0 %799
    %v801 = vcvt.f32.s32 %v800
    %v802 = vcvt.f32.s32 %v796
    %v803 = vshll.u32 %v802, 16
    %v804 = vadd.s32 %v803, %v801
    %v805 = vand.u32 %v607, 65535
    %v806 = vshra.s32 %v607, 16
    %v807 = vcvt.s32.f32 %v805
    %v808 = vcvt.s32.f32 %v806
    %809 = vmin.xlane.f32.xlu0 %v808
    %v810 = vpop.xlane.xlu0 %809
    %vm811 = vcmp.eq.f32.partialorder %v808, %v810
    %v812 = vsel %vm811, %v807, inf
    %813 = vmin.xlane.f32.xlu0 %v812
    %v814 = vpop.xlane.xlu0 %813
    %v815 = vcvt.f32.s32 %v814
    %v816 = vcvt.f32.s32 %v810
    %v817 = vshll.u32 %v816, 16
    %v818 = vadd.s32 %v817, %v815
    %v819 = vand.u32 %v608, 65535
    %v820 = vshra.s32 %v608, 16
    %v821 = vcvt.s32.f32 %v819
    %v822 = vcvt.s32.f32 %v820
    %823 = vmin.xlane.f32.xlu0 %v822
    %v824 = vpop.xlane.xlu0 %823
    %vm825 = vcmp.eq.f32.partialorder %v822, %v824
    %v826 = vsel %vm825, %v821, inf
    %827 = vmin.xlane.f32.xlu0 %v826
    %v828 = vpop.xlane.xlu0 %827
    %v829 = vcvt.f32.s32 %v828
    %v830 = vcvt.f32.s32 %v824
    %v831 = vshll.u32 %v830, 16
    %v832 = vadd.s32 %v831, %v829
    %vm833 = vcmp.eq.s32.totalorder %v622, %v344
    %vm834 = vcmp.eq.s32.totalorder %v636, %v344
    %vm835 = vcmp.eq.s32.totalorder %v650, %v344
    %vm836 = vcmp.eq.s32.totalorder %v664, %v344
    %vm837 = vcmp.eq.s32.totalorder %v678, %v344
    %vm838 = vcmp.eq.s32.totalorder %v692, %v344
    %vm839 = vcmp.eq.s32.totalorder %v706, %v344
    %vm840 = vcmp.eq.s32.totalorder %v720, %v344
    %vm841 = vcmp.eq.s32.totalorder %v734, %v344
    %vm842 = vcmp.eq.s32.totalorder %v748, %v344
    %vm843 = vcmp.eq.s32.totalorder %v762, %v344
    %vm844 = vcmp.eq.s32.totalorder %v776, %v344
    %vm845 = vcmp.eq.s32.totalorder %v790, %v344
    %vm846 = vcmp.eq.s32.totalorder %v804, %v344
    %vm847 = vcmp.eq.s32.totalorder %v818, %v344
    %vm848 = vcmp.eq.s32.totalorder %v832, %v344
    %v849 = vsel %vm833, 1, 0
    %v850 = vsel %vm834, 1, 0
    %v851 = vsel %vm835, 1, 0
    %v852 = vsel %vm836, 1, 0
    %v853 = vsel %vm837, 1, 0
    %v854 = vsel %vm838, 1, 0
    %v855 = vsel %vm839, 1, 0
    %v856 = vsel %vm840, 1, 0
    %v857 = vsel %vm841, 1, 0
    %v858 = vsel %vm842, 1, 0
    %v859 = vsel %vm843, 1, 0
    %v860 = vsel %vm844, 1, 0
    %v861 = vsel %vm845, 1, 0
    %v862 = vsel %vm846, 1, 0
    %v863 = vsel %vm847, 1, 0
    %v864 = vsel %vm848, 1, 0
    %v865 = vcvt.s32.f32 %v849
    %v866 = vcvt.s32.f32 %v850
    %v867 = vcvt.s32.f32 %v851
    %v868 = vcvt.s32.f32 %v852
    %v869 = vcvt.s32.f32 %v853
    %v870 = vcvt.s32.f32 %v854
    %v871 = vcvt.s32.f32 %v855
    %v872 = vcvt.s32.f32 %v856
    %v873 = vcvt.s32.f32 %v857
    %v874 = vcvt.s32.f32 %v858
    %v875 = vcvt.s32.f32 %v859
    %v876 = vcvt.s32.f32 %v860
    %v877 = vcvt.s32.f32 %v861
    %v878 = vcvt.s32.f32 %v862
    %v879 = vcvt.s32.f32 %v863
    %v880 = vcvt.s32.f32 %v864
    %v881 = vpack.c.bf16 %v866, %v865
    %v882 = vpack.c.bf16 %v868, %v867
    %v883 = vpack.c.bf16 %v870, %v869
    %v884 = vpack.c.bf16 %v872, %v871
    %v885 = vpack.c.bf16 %v874, %v873
    %v886 = vpack.c.bf16 %v876, %v875
    %v887 = vpack.c.bf16 %v878, %v877
    %v888 = vpack.c.bf16 %v880, %v879
    %889 = vmatprep.subr.bf16.mxu0 0
    %890 = vmatpush1.bf16.msra.mxu0 %v393
    %891 = vmatprep.subr.bf16.mxu0 0
    %892 = vmatpush1.bf16.msra.mxu0 %v394
    %893 = vmatprep.subr.bf16.mxu0 0
    %894 = vmatpush1.bf16.msra.mxu0 %v395
    %895 = vmatprep.subr.bf16.mxu0 0
    %896 = vmatpush1.bf16.msra.mxu0 %v396
    %897 = vmatprep.subr.bf16.mxu0 0
    %898 = vmatpush1.bf16.msra.mxu0 %v397
    %899 = vmatprep.subr.bf16.mxu0 0
    %900 = vmatpush1.bf16.msra.mxu0 %v398
    %901 = vmatprep.subr.bf16.mxu0 0
    %902 = vmatpush1.bf16.msra.mxu0 %v399
    %903 = vmatprep.subr.bf16.mxu0 0
    %904 = vmatpush1.bf16.msra.mxu0 %v400
    %905 = vmatprep.subr.bf16.mxu0 0
    %906 = vmatpush1.bf16.msra.mxu0 0
    %907 = vmatprep.subr.bf16.mxu0 0
    %908 = vmatpush1.bf16.msra.mxu0 0
    %909 = vmatprep.subr.bf16.mxu0 0
    %910 = vmatpush1.bf16.msra.mxu0 0
    %911 = vmatprep.subr.bf16.mxu0 0
    %912 = vmatpush1.bf16.msra.mxu0 0
    %913 = vmatprep.subr.bf16.mxu0 0
    %914 = vmatpush1.bf16.msra.mxu0 0
    %915 = vmatprep.subr.bf16.mxu0 0
    %916 = vmatpush1.bf16.msra.mxu0 0
    %917 = vmatprep.subr.bf16.mxu0 0
    %918 = vmatpush1.bf16.msra.mxu0 0
    %919 = vmatprep.subr.bf16.mxu0 0
    %920 = vmatpush1.bf16.msra.mxu0 0
    %921 = vmatprep.mubr.bf16.mxu0 0
    %922 = vmatmul.mubr.bf16.gmra.mrb[0].mxu0 %v881
    %v923 = vpop.f32.mrb[0].mxu0
    %v924 = vadd.f32 0.0, %v923
    %v925 = vpop.f32.mrb[0].mxu0
    %v926 = vpop.f32.mrb[0].mxu0
    %v927 = vadd.f32 0.0, %v926
    %v928 = vpop.f32.mrb[0].mxu0
    %929 = vmatprep.mubr.bf16.mxu0 0
    %930 = vmatmul.mubr.bf16.gmra.mrb[0].mxu0 %v882
    %v931 = vpop.f32.mrb[0].mxu0
    %v932 = vadd.f32 0.0, %v931
    %v933 = vpop.f32.mrb[0].mxu0
    %v934 = vpop.f32.mrb[0].mxu0
    %v935 = vadd.f32 0.0, %v934
    %v936 = vpop.f32.mrb[0].mxu0
    %937 = vmatprep.mubr.bf16.mxu0 0
    %938 = vmatmul.mubr.bf16.gmra.mrb[0].mxu0 %v883
    %v939 = vpop.f32.mrb[0].mxu0
    %v940 = vadd.f32 0.0, %v939
    %v941 = vpop.f32.mrb[0].mxu0
    %v942 = vpop.f32.mrb[0].mxu0
    %v943 = vadd.f32 0.0, %v942
    %v944 = vpop.f32.mrb[0].mxu0
    %945 = vmatprep.mubr.bf16.mxu0 0
    %946 = vmatmul.mubr.bf16.gmra.mrb[0].mxu0 %v884
    %v947 = vpop.f32.mrb[0].mxu0
    %v948 = vadd.f32 0.0, %v947
    %v949 = vpop.f32.mrb[0].mxu0
    %v950 = vpop.f32.mrb[0].mxu0
    %v951 = vadd.f32 0.0, %v950
    %v952 = vpop.f32.mrb[0].mxu0
    %953 = vmatprep.mubr.bf16.mxu0 0
    %954 = vmatmul.mubr.bf16.gmra.mrb[0].mxu0 %v885
    %v955 = vpop.f32.mrb[0].mxu0
    %v956 = vadd.f32 0.0, %v955
    %v957 = vpop.f32.mrb[0].mxu0
    %v958 = vpop.f32.mrb[0].mxu0
    %v959 = vadd.f32 0.0, %v958
    %v960 = vpop.f32.mrb[0].mxu0
    %961 = vmatprep.mubr.bf16.mxu0 0
    %962 = vmatmul.mubr.bf16.gmra.mrb[0].mxu0 %v886
    %v963 = vpop.f32.mrb[0].mxu0
    %v964 = vadd.f32 0.0, %v963
    %v965 = vpop.f32.mrb[0].mxu0
    %v966 = vpop.f32.mrb[0].mxu0
    %v967 = vadd.f32 0.0, %v966
    %v968 = vpop.f32.mrb[0].mxu0
    %969 = vmatprep.mubr.bf16.mxu0 0
    %970 = vmatmul.mubr.bf16.gmra.mrb[0].mxu0 %v887
    %v971 = vpop.f32.mrb[0].mxu0
    %v972 = vadd.f32 0.0, %v971
    %v973 = vpop.f32.mrb[0].mxu0
    %v974 = vpop.f32.mrb[0].mxu0
    %v975 = vadd.f32 0.0, %v974
    %v976 = vpop.f32.mrb[0].mxu0
    %977 = vmatprep.mubr.bf16.mxu0 0
    %978 = vmatmul.mubr.bf16.gmra.mrb[0].mxu0 %v888
    %v979 = vpop.f32.mrb[0].mxu0
    %v980 = vadd.f32 0.0, %v979
    %v981 = vpop.f32.mrb[0].mxu0
    %v982 = vpop.f32.mrb[0].mxu0
    %v983 = vadd.f32 0.0, %v982
    %v984 = vpop.f32.mrb[0].mxu0
    %985 = vdwg.mxu0
    %vm986 = vcmp.lt.f32.partialorder %v546, inf
    %vm987 = vcmp.lt.f32.partialorder %v548, inf
    %vm988 = vcmp.lt.f32.partialorder %v550, inf
    %vm989 = vcmp.lt.f32.partialorder %v552, inf
    %vm990 = vcmp.lt.f32.partialorder %v554, inf
    %vm991 = vcmp.lt.f32.partialorder %v556, inf
    %vm992 = vcmp.lt.f32.partialorder %v558, inf
    %vm993 = vcmp.lt.f32.partialorder %v560, inf
    %vm994 = vcmp.lt.f32.partialorder %v562, inf
    %vm995 = vcmp.lt.f32.partialorder %v564, inf
    %vm996 = vcmp.lt.f32.partialorder %v566, inf
    %vm997 = vcmp.lt.f32.partialorder %v568, inf
    %vm998 = vcmp.lt.f32.partialorder %v570, inf
    %vm999 = vcmp.lt.f32.partialorder %v572, inf
    %vm1000 = vcmp.lt.f32.partialorder %v574, inf
    %vm1001 = vcmp.lt.f32.partialorder %v576, inf
    %v1002 = vsel %vm986, 1, 0
    %v1003 = vsel %vm987, 1, 0
    %v1004 = vsel %vm988, 1, 0
    %v1005 = vsel %vm989, 1, 0
    %v1006 = vsel %vm990, 1, 0
    %v1007 = vsel %vm991, 1, 0
    %v1008 = vsel %vm992, 1, 0
    %v1009 = vsel %vm993, 1, 0
    %v1010 = vsel %vm994, 1, 0
    %v1011 = vsel %vm995, 1, 0
    %v1012 = vsel %vm996, 1, 0
    %v1013 = vsel %vm997, 1, 0
    %v1014 = vsel %vm998, 1, 0
    %v1015 = vsel %vm999, 1, 0
    %v1016 = vsel %vm1000, 1, 0
    %v1017 = vsel %vm1001, 1, 0
    %vm1018 = vcmp.eq.s32.totalorder %v1002, 1
    %vm1019 = vcmp.eq.s32.totalorder %v1003, 1
    %vm1020 = vcmp.eq.s32.totalorder %v1004, 1
    %vm1021 = vcmp.eq.s32.totalorder %v1005, 1
    %vm1022 = vcmp.eq.s32.totalorder %v1006, 1
    %vm1023 = vcmp.eq.s32.totalorder %v1007, 1
    %vm1024 = vcmp.eq.s32.totalorder %v1008, 1
    %vm1025 = vcmp.eq.s32.totalorder %v1009, 1
    %vm1026 = vcmp.eq.s32.totalorder %v1010, 1
    %vm1027 = vcmp.eq.s32.totalorder %v1011, 1
    %vm1028 = vcmp.eq.s32.totalorder %v1012, 1
    %vm1029 = vcmp.eq.s32.totalorder %v1013, 1
    %vm1030 = vcmp.eq.s32.totalorder %v1014, 1
    %vm1031 = vcmp.eq.s32.totalorder %v1015, 1
    %vm1032 = vcmp.eq.s32.totalorder %v1016, 1
    %vm1033 = vcmp.eq.s32.totalorder %v1017, 1
    %v1034 = vsel %vm1018, %v924, 0.0
    %v1035 = vsel %vm1019, %v927, 0.0
    %v1036 = vsel %vm1020, %v932, 0.0
    %v1037 = vsel %vm1021, %v935, 0.0
    %v1038 = vsel %vm1022, %v940, 0.0
    %v1039 = vsel %vm1023, %v943, 0.0
    %v1040 = vsel %vm1024, %v948, 0.0
    %v1041 = vsel %vm1025, %v951, 0.0
    %v1042 = vsel %vm1026, %v956, 0.0
    %v1043 = vsel %vm1027, %v959, 0.0
    %v1044 = vsel %vm1028, %v964, 0.0
    %v1045 = vsel %vm1029, %v967, 0.0
    %v1046 = vsel %vm1030, %v972, 0.0
    %v1047 = vsel %vm1031, %v975, 0.0
    %v1048 = vsel %vm1032, %v980, 0.0
    %v1049 = vsel %vm1033, %v983, 0.0
    %1050 = vst [vmem:[#allocation11] sm:$0xff] %v1034
    %1051 = vst [vmem:[#allocation11 + $0x8] sm:$0xff] %v1035
    %1052 = vst [vmem:[#allocation11 + $0x10] sm:$0xff] %v1036
    %1053 = vst [vmem:[#allocation11 + $0x18] sm:$0xff] %v1037
    %1054 = vst [vmem:[#allocation11 + $0x20] sm:$0xff] %v1038
    %1055 = vst [vmem:[#allocation11 + $0x28] sm:$0xff] %v1039
    %1056 = vst [vmem:[#allocation11 + $0x30] sm:$0xff] %v1040
    %1057 = vst [vmem:[#allocation11 + $0x38] sm:$0xff] %v1041
    %1058 = vst [vmem:[#allocation11 + $0x40] sm:$0xff] %v1042
    %1059 = vst [vmem:[#allocation11 + $0x48] sm:$0xff] %v1043
    %1060 = vst [vmem:[#allocation11 + $0x50] sm:$0xff] %v1044
    %1061 = vst [vmem:[#allocation11 + $0x58] sm:$0xff] %v1045
    %1062 = vst [vmem:[#allocation11 + $0x60] sm:$0xff] %v1046
    %1063 = vst [vmem:[#allocation11 + $0x68] sm:$0xff] %v1047
    %1064 = vst [vmem:[#allocation11 + $0x70] sm:$0xff] %v1048
    %1065 = vst [vmem:[#allocation11 + $0x78] sm:$0xff] %v1049
    %v1066 = vpack.c.bf16 %v1035, %v1034
    %v1067 = vpack.c.bf16 %v1037, %v1036
    %v1068 = vpack.c.bf16 %v1039, %v1038
    %v1069 = vpack.c.bf16 %v1041, %v1040
    %v1070 = vpack.c.bf16 %v1043, %v1042
    %v1071 = vpack.c.bf16 %v1045, %v1044
    %v1072 = vpack.c.bf16 %v1047, %v1046
    %v1073 = vpack.c.bf16 %v1049, %v1048
    %v1074 = vld [vmem:[#allocation8] sm:$0xf]
    %v1075 = vld [vmem:[#allocation8 + $0x4] sm:$0xf]
    %v1076 = vld [vmem:[#allocation8 + $0x8] sm:$0xf]
    %v1077 = vld [vmem:[#allocation8 + $0xc] sm:$0xf]
    %v1078 = vld [vmem:[#allocation8 + $0x10] sm:$0xf]
    %v1079 = vld [vmem:[#allocation8 + $0x14] sm:$0xf]
    %v1080 = vld [vmem:[#allocation8 + $0x18] sm:$0xf]
    %v1081 = vld [vmem:[#allocation8 + $0x1c] sm:$0xf]
    %v1082 = vld [vmem:[#allocation8 + $0x20] sm:$0xf]
    %v1083 = vld [vmem:[#allocation8 + $0x24] sm:$0xf]
    %v1084 = vld [vmem:[#allocation8 + $0x28] sm:$0xf]
    %v1085 = vld [vmem:[#allocation8 + $0x2c] sm:$0xf]
    %v1086 = vld [vmem:[#allocation8 + $0x30] sm:$0xf]
    %v1087 = vld [vmem:[#allocation8 + $0x34] sm:$0xf]
    %v1088 = vld [vmem:[#allocation8 + $0x38] sm:$0xf]
    %v1089 = vld [vmem:[#allocation8 + $0x3c] sm:$0xf]
    %v1090 = vld [vmem:[%s6] sm:$0x1]
    %v1092 = vlaneseq
    %v1093 = vshrl.u32 %v1092, 7
    %v1094 = vsub.s32 0, %v1093
    %v1095 = vrot.slane %v1090, %v1094
    %v1113 = vunpack.c.l.b16 %v1074
    %v1114 = vunpack.c.l.b16 %v1075
    %v1115 = vunpack.c.l.b16 %v1076
    %v1116 = vunpack.c.l.b16 %v1077
    %v1117 = vunpack.c.l.b16 %v1078
    %v1118 = vunpack.c.l.b16 %v1079
    %v1119 = vunpack.c.l.b16 %v1080
    %v1120 = vunpack.c.l.b16 %v1081
    %v1121 = vunpack.c.l.b16 %v1082
    %v1122 = vunpack.c.l.b16 %v1083
    %v1123 = vunpack.c.l.b16 %v1084
    %v1124 = vunpack.c.l.b16 %v1085
    %v1125 = vunpack.c.l.b16 %v1086
    %v1126 = vunpack.c.l.b16 %v1087
    %v1127 = vunpack.c.l.b16 %v1088
    %v1128 = vunpack.c.l.b16 %v1089
    %v1129 = vpack.c.b16 %v1114, %v1113
    %v1130 = vpack.c.b16 %v1116, %v1115
    %v1131 = vpack.c.b16 %v1118, %v1117
    %v1132 = vpack.c.b16 %v1120, %v1119
    %v1133 = vpack.c.b16 %v1122, %v1121
    %v1134 = vpack.c.b16 %v1124, %v1123
    %v1135 = vpack.c.b16 %v1126, %v1125
    %v1136 = vpack.c.b16 %v1128, %v1127
    %1145 = vmatprep.subr.bf16.mxu0 0
    %1146 = vmatpush1.bf16.msra.mxu0 %v1129
    %1147 = vmatprep.subr.bf16.mxu0 0
    %1148 = vmatpush1.bf16.msra.mxu0 %v1130
    %1149 = vmatprep.subr.bf16.mxu0 0
    %1150 = vmatpush1.bf16.msra.mxu0 %v1131
    %1151 = vmatprep.subr.bf16.mxu0 0
    %1152 = vmatpush1.bf16.msra.mxu0 %v1132
    %1153 = vmatprep.subr.bf16.mxu0 0
    %1154 = vmatpush1.bf16.msra.mxu0 %v1133
    %1155 = vmatprep.subr.bf16.mxu0 0
    %1156 = vmatpush1.bf16.msra.mxu0 %v1134
    %1157 = vmatprep.subr.bf16.mxu0 0
    %1158 = vmatpush1.bf16.msra.mxu0 %v1135
    %1159 = vmatprep.subr.bf16.mxu0 0
    %1160 = vmatpush1.bf16.msra.mxu0 %v1136
    %1161 = vmatprep.subr.bf16.mxu0 0
    %1162 = vmatpush1.bf16.msra.mxu0 0
    %1163 = vmatprep.subr.bf16.mxu0 0
    %1164 = vmatpush1.bf16.msra.mxu0 0
    %1165 = vmatprep.subr.bf16.mxu0 0
    %1166 = vmatpush1.bf16.msra.mxu0 0
    %1167 = vmatprep.subr.bf16.mxu0 0
    %1168 = vmatpush1.bf16.msra.mxu0 0
    %1169 = vmatprep.subr.bf16.mxu0 0
    %1170 = vmatpush1.bf16.msra.mxu0 0
    %1171 = vmatprep.subr.bf16.mxu0 0
    %1172 = vmatpush1.bf16.msra.mxu0 0
    %1173 = vmatprep.subr.bf16.mxu0 0
    %1174 = vmatpush1.bf16.msra.mxu0 0
    %1175 = vmatprep.subr.bf16.mxu0 0
    %1176 = vmatpush1.bf16.msra.mxu0 0
    %1177 = vmatprep.mubr.bf16.mxu0 0
    %1178 = vmatmul.mubr.bf16.gmra.mrb[0].mxu0 %v1066
    %v1179 = vpop.f32.mrb[0].mxu0
    %v1180 = vadd.f32 %v1095, %v1179
    %v1181 = vpop.f32.mrb[0].mxu0
    %v1182 = vpop.f32.mrb[0].mxu0
    %v1183 = vadd.f32 %v1095, %v1182
    %v1184 = vpop.f32.mrb[0].mxu0
    %1185 = vmatprep.mubr.bf16.mxu0 0
    %1186 = vmatmul.mubr.bf16.gmra.mrb[0].mxu0 %v1067
    %v1187 = vpop.f32.mrb[0].mxu0
    %v1188 = vadd.f32 %v1095, %v1187
    %v1189 = vpop.f32.mrb[0].mxu0
    %v1190 = vpop.f32.mrb[0].mxu0
    %v1191 = vadd.f32 %v1095, %v1190
    %v1192 = vpop.f32.mrb[0].mxu0
    %1193 = vmatprep.mubr.bf16.mxu0 0
    %1194 = vmatmul.mubr.bf16.gmra.mrb[0].mxu0 %v1068
    %v1195 = vpop.f32.mrb[0].mxu0
    %v1196 = vadd.f32 %v1095, %v1195
    %v1197 = vpop.f32.mrb[0].mxu0
    %v1198 = vpop.f32.mrb[0].mxu0
    %v1199 = vadd.f32 %v1095, %v1198
    %v1200 = vpop.f32.mrb[0].mxu0
    %1201 = vmatprep.mubr.bf16.mxu0 0
    %1202 = vmatmul.mubr.bf16.gmra.mrb[0].mxu0 %v1069
    %v1203 = vpop.f32.mrb[0].mxu0
    %v1204 = vadd.f32 %v1095, %v1203
    %v1205 = vpop.f32.mrb[0].mxu0
    %v1206 = vpop.f32.mrb[0].mxu0
    %v1207 = vadd.f32 %v1095, %v1206
    %v1208 = vpop.f32.mrb[0].mxu0
    %1209 = vmatprep.mubr.bf16.mxu0 0
    %1210 = vmatmul.mubr.bf16.gmra.mrb[0].mxu0 %v1070
    %v1211 = vpop.f32.mrb[0].mxu0
    %v1212 = vadd.f32 %v1095, %v1211
    %v1213 = vpop.f32.mrb[0].mxu0
    %v1214 = vpop.f32.mrb[0].mxu0
    %v1215 = vadd.f32 %v1095, %v1214
    %v1216 = vpop.f32.mrb[0].mxu0
    %1217 = vmatprep.mubr.bf16.mxu0 0
    %1218 = vmatmul.mubr.bf16.gmra.mrb[0].mxu0 %v1071
    %v1219 = vpop.f32.mrb[0].mxu0
    %v1220 = vadd.f32 %v1095, %v1219
    %v1221 = vpop.f32.mrb[0].mxu0
    %v1222 = vpop.f32.mrb[0].mxu0
    %v1223 = vadd.f32 %v1095, %v1222
    %v1224 = vpop.f32.mrb[0].mxu0
    %1225 = vmatprep.mubr.bf16.mxu0 0
    %1226 = vmatmul.mubr.bf16.gmra.mrb[0].mxu0 %v1072
    %v1227 = vpop.f32.mrb[0].mxu0
    %v1228 = vadd.f32 %v1095, %v1227
    %v1229 = vpop.f32.mrb[0].mxu0
    %v1230 = vpop.f32.mrb[0].mxu0
    %v1231 = vadd.f32 %v1095, %v1230
    %v1232 = vpop.f32.mrb[0].mxu0
    %1233 = vmatprep.mubr.bf16.mxu0 0
    %1234 = vmatmul.mubr.bf16.gmra.mrb[0].mxu0 %v1073
    %v1235 = vpop.f32.mrb[0].mxu0
    %v1236 = vadd.f32 %v1095, %v1235
    %v1237 = vpop.f32.mrb[0].mxu0
    %v1238 = vpop.f32.mrb[0].mxu0
    %v1239 = vadd.f32 %v1095, %v1238
    %v1240 = vpop.f32.mrb[0].mxu0
    %1241 = vdwg.mxu0
    %1242 = vst [vmem:[#allocation13] sm:$0xff] %v1180
    %1243 = vst [vmem:[#allocation13 + $0x8] sm:$0xff] %v1183
    %1244 = vst [vmem:[#allocation13 + $0x10] sm:$0xff] %v1188
    %1245 = vst [vmem:[#allocation13 + $0x18] sm:$0xff] %v1191
    %1246 = vst [vmem:[#allocation13 + $0x20] sm:$0xff] %v1196
    %1247 = vst [vmem:[#allocation13 + $0x28] sm:$0xff] %v1199
    %1248 = vst [vmem:[#allocation13 + $0x30] sm:$0xff] %v1204
    %1249 = vst [vmem:[#allocation13 + $0x38] sm:$0xff] %v1207
    %1250 = vst [vmem:[#allocation13 + $0x40] sm:$0xff] %v1212
    %1251 = vst [vmem:[#allocation13 + $0x48] sm:$0xff] %v1215
    %1252 = vst [vmem:[#allocation13 + $0x50] sm:$0xff] %v1220
    %1253 = vst [vmem:[#allocation13 + $0x58] sm:$0xff] %v1223
    %1254 = vst [vmem:[#allocation13 + $0x60] sm:$0xff] %v1228
    %1255 = vst [vmem:[#allocation13 + $0x68] sm:$0xff] %v1231
    %1256 = vst [vmem:[#allocation13 + $0x70] sm:$0xff] %v1236
    %1257 = vst [vmem:[#allocation13 + $0x78] sm:$0xff] %v1239
    // Predicated region
    $region46: #{tpu_custom_call.1} parent=1 // pred_check
      _
    $region47: #{tpu_custom_call.1} parent=1 // pred_check_branch
      %1259 = sbr.rel (0) target = $region49
    $region48: #{tpu_custom_call.1} parent=1 // pred_region
      %s1261 = ssub.s32 2048, 2048
      %1262 = vsyncadd [#allocation4], %s1261
      %s1263 = sshll.u32 [#allocation10], 4
      %s1264 = int_to_ptr.vmem [resolvable:$true] %s1263
      %1269 = dma.vmem_to_hbm [thread:$0]  %s1264, 2048, %s7, [#allocation4], 128, 128, 8
    $region49: #{tpu_custom_call.1} parent=1 // pred_fallthru
      _
    // Predicated region
    $region50: #{tpu_custom_call.1} parent=1 // pred_check
      _
    $region51: #{tpu_custom_call.1} parent=1 // pred_check_branch
      %1271 = sbr.rel (0) target = $region53
    $region52: #{tpu_custom_call.1} parent=1 // pred_region
      %s1273 = ssub.s32 2048, 2048
      %1274 = vsyncadd [#allocation12], %s1273
      %s1275 = sshll.u32 [#allocation11], 4
      %s1276 = int_to_ptr.vmem [resolvable:$true] %s1275
      %1281 = dma.vmem_to_hbm [thread:$0]  %s1276, 2048, %s8, [#allocation12], 128, 128, 8
    $region53: #{tpu_custom_call.1} parent=1 // pred_fallthru
      _
    // Predicated region
    $region54: #{tpu_custom_call.1} parent=1 // pred_check
      _
    $region55: #{tpu_custom_call.1} parent=1 // pred_check_branch
      %1283 = sbr.rel (0) target = $region57
    $region56: #{tpu_custom_call.1} parent=1 // pred_region
      %s1285 = ssub.s32 2048, 2048
      %1286 = vsyncadd [#allocation12], %s1285
      %s1287 = sshll.u32 [#allocation13], 4
      %s1288 = int_to_ptr.vmem [resolvable:$true] %s1287
      %1293 = dma.vmem_to_hbm [thread:$0]  %s1288, 2048, %s9, [#allocation12], 128, 128, 8
    $region57: #{tpu_custom_call.1} parent=1 // pred_fallthru
      _
    // Predicated region
    $region58: #{tpu_custom_call.1} parent=1 // pred_check
      _
    $region59: #{tpu_custom_call.1} parent=1 // pred_check_branch
      %1295 = sbr.rel (0) target = $region61
    $region60: #{tpu_custom_call.1} parent=1 // pred_region
      %1296 = dma.done [#allocation4], 2048
    $region61: #{tpu_custom_call.1} parent=1 // pred_fallthru
      _
    // Predicated region
    $region62: #{tpu_custom_call.1} parent=1 // pred_check
      _
    $region63: #{tpu_custom_call.1} parent=1 // pred_check_branch
      %1298 = sbr.rel (0) target = $region65
    $region64: #{tpu_custom_call.1} parent=1 // pred_region
      %1299 = dma.done [#allocation12], 2048
    $region65: #{tpu_custom_call.1} parent=1 // pred_fallthru
      _
    // Predicated region
    $region66: #{tpu_custom_call.1} parent=1 // pred_check
      _
    $region67: #{tpu_custom_call.1} parent=1 // pred_check_branch
      %1301 = sbr.rel (0) target = $region69
    $region68: #{tpu_custom_call.1} parent=1 // pred_region
      %1302 = dma.done [#allocation12], 2048
    $region69: #{tpu_custom_call.1} parent=1 // pred_fallthru
      _
    %1303 = vsyncpa [#allocation3], 1
    %1304 = vsyncpa [#allocation6], 1
    %1305 = vsyncpa [#allocation9], 1
    %1306 = vsyncpa [#allocation4], 1
    %1307 = vsyncpa [#allocation12], 1

</llo_original>
